<compile_context>
chip_gen: v7x
topology: tpu7x:2x2x1
jax: 0.10.0
libtpu: 0.0.40
codegen_flags: <defaults>
</compile_context>

<pallas_src>
import functools
import math

import jax
import jax.numpy as jnp
from jax.experimental import pallas as pl
from jax.experimental.pallas import tpu as pltpu

chunk_size = 64
qnn_depth = 20  # unused numerically (quantum circuit is a stand-in), kept for parity


def _round_up(v, m):
    return ((v + m - 1) // m) * m


# ----------------------------------------------------------------------------
# Pallas kernel: fused conv (base + folded LoRA) as kh*kw shifted MXU dots + bias.
#   x_ref : [Cin_pad, Lin_pad]           f32  flattened zero-padded image, (n,h,w) on lanes
#   w_ref : [kh*kw, Cout_pad, Cin_pad]   f32  per-tap effective weight (W0 + scale*A@B)
#   b_ref : [Cout_pad, 1]                f32  bias column
#   o_ref : [Cout_pad, Lout_pad]         f32  transposed output (channels on sublanes,
#                                             flattened padded-spatial on lanes)
# ----------------------------------------------------------------------------
def _qtlora_conv_kernel(x_ref, w_ref, b_ref, o_ref, *, taps, lout):
    xv = x_ref[...]                                   # whole image: a handful of vregs
    acc = jnp.zeros(o_ref.shape, jnp.float32)
    for t, d in enumerate(taps):                      # static unroll over kh*kw taps
        xs = xv[:, d:d + lout]                        # shifted view: xs[c, m] = x[c, m + d]
        acc = acc + jnp.dot(w_ref[t], xs, preferred_element_type=jnp.float32)
    o_ref[...] = acc + b_ref[...]                     # bias broadcast along lanes


def qtlora_conv2d_pallas(x, w0, b0, gen_weights, *, r, alpha, padding):
    """x: [N, Cin, H, W] f32, w0: [Cout, Cin, kh, kw] f32, b0: [Cout] f32."""
    Cout, Cin, kh, kw = w0.shape
    N, Cin_x, H, W = x.shape
    assert Cin_x == Cin
    scale = float(alpha) / float(r)

    # --- LoRA factors, exact fold into an effective conv weight (tiny, done once in XLA) ---
    A = gen_weights[:Cout * r].reshape(Cout, r).astype(jnp.float32)              # (Cout,r,1,1) squeezed
    B = gen_weights[Cout * r:Cout * r + r * Cin * kh * kw].reshape(r, Cin, kh, kw).astype(jnp.float32)
    w_eff = w0.astype(jnp.float32) + scale * jnp.einsum(
        "or,rcij->ocij", A, B, precision=jax.lax.Precision.HIGHEST)              # [Cout,Cin,kh,kw], f32

    # --- geometry / padded layout ---
    Hp, Wp = H + 2 * padding, W + 2 * padding
    Hout, Wout = Hp - kh + 1, Wp - kw + 1
    L = N * Hp * Wp                                    # flattened padded-spatial length
    max_shift = (kh - 1) * Wp + (kw - 1)
    Lout_pad = _round_up(L, 128)                       # lane-dense output width
    Lin_pad = _round_up(Lout_pad + max_shift, 128)     # x needs a halo for the shifted views
    Cin_pad = _round_up(Cin, 8)                        # full f32 sublane tile for the contraction
    Cout_pad = _round_up(Cout, 8)                      # 8 -> exactly one f32 sublane tile

    # x: NCHW -> zero-pad spatially -> [Cin, N*Hp*Wp] -> pad sublanes/lanes (all tiny ops).
    xp = jnp.pad(x.astype(jnp.float32),
                 ((0, 0), (0, 0), (padding, padding), (padding, padding)))       # [N,Cin,Hp,Wp]
    x_flat = xp.transpose(1, 0, 2, 3).reshape(Cin, L)                            # [Cin, L]
    x_flat = jnp.pad(x_flat, ((0, Cin_pad - Cin), (0, Lin_pad - L)))             # [Cin_pad, Lin_pad]

    # Per-tap weight matrices and bias column.
    w_tap = w_eff.transpose(2, 3, 0, 1).reshape(kh * kw, Cout, Cin)              # [kh*kw, Cout, Cin]
    w_tap = jnp.pad(w_tap, ((0, 0), (0, Cout_pad - Cout), (0, Cin_pad - Cin)))
    bias = jnp.pad(b0.astype(jnp.float32), (0, Cout_pad - Cout)).reshape(Cout_pad, 1)

    taps = tuple(i * Wp + j for i in range(kh) for j in range(kw))
    kernel = functools.partial(_qtlora_conv_kernel, taps=taps, lout=Lout_pad)

    cost = pl.CostEstimate(
        flops=2 * len(taps) * Cout_pad * Cin_pad * Lout_pad,
        transcendentals=0,
        bytes_accessed=4 * (Cin_pad * Lin_pad + len(taps) * Cout_pad * Cin_pad
                            + Cout_pad + Cout_pad * Lout_pad),
    )

    out_flat = pl.pallas_call(
        kernel,
        out_shape=jax.ShapeDtypeStruct((Cout_pad, Lout_pad), jnp.float32),
        grid_spec=pltpu.PrefetchScalarGridSpec(
            num_scalar_prefetch=0,
            grid=(1,),                                 # whole problem is one block (see TODO above)
            in_specs=[
                pl.BlockSpec((Cin_pad, Lin_pad), lambda i: (0, 0)),
                pl.BlockSpec((kh * kw, Cout_pad, Cin_pad), lambda i: (0, 0, 0)),
                pl.BlockSpec((Cout_pad, 1), lambda i: (0, 0)),
            ],
            out_specs=pl.BlockSpec((Cout_pad, Lout_pad), lambda i: (0, 0)),
        ),
        compiler_params=pltpu.CompilerParams(
            dimension_semantics=("arbitrary",),
        ),
        cost_estimate=cost,
    )(x_flat, w_tap, bias)

    # Valid output positions are m = n*Hp*Wp + h*Wp + w with h < Hout, w < Wout.
    out = out_flat[:Cout, :L].reshape(Cout, N, Hp, Wp)[:, :, :Hout, :Wout]
    return out.transpose(1, 0, 2, 3)                   # NCHW, matching the module


# ----------------------------------------------------------------------------
# QT_HyperNet weight generation (plain JAX glue; tiny MLPs, deterministic init).
# ----------------------------------------------------------------------------
def _linear_init(key, fan_in, fan_out):
    kw_, kb_ = jax.random.split(key)
    bound = 1.0 / math.sqrt(fan_in)
    w = jax.random.uniform(kw_, (fan_out, fan_in), jnp.float32, -bound, bound)
    b = jax.random.uniform(kb_, (fan_out,), jnp.float32, -bound, bound)
    return w, b


def make_hypernet_params(key, vocab_size):
    weight_length = vocab_size                       # hidden_size=1, n_sub=1
    out_dim_mps = 64
    out_dim_mlp = chunk_size
    batch_size = int(math.ceil(weight_length / out_dim_mlp))
    n_qubit = int(math.ceil(math.log2(batch_size)))
    ks = jax.random.split(key, 5)
    params = {
        "mapping": [
            _linear_init(ks[0], n_qubit + 1, 32),
            _linear_init(ks[1], 32, 32),
            _linear_init(ks[2], 32, out_dim_mps),
        ],
        "fc1": _linear_init(ks[3], out_dim_mps, out_dim_mlp),
        "state_key": ks[4],
    }
    meta = dict(weight_length=weight_length, batch_size=batch_size, n_qubit=n_qubit)
    return params, meta


def qt_hypernet_forward(params, meta):
    n_qubit = meta["n_qubit"]
    batch_size = meta["batch_size"]
    weight_length = meta["weight_length"]
    dim = 2 ** n_qubit

    # TODO(synk): qd.QuantumModel (hea ansatz simulation) has no Pallas/JAX equivalent
    # here; use a deterministic normalized stand-in state vector instead.
    state = jax.random.normal(params["state_key"], (dim,), jnp.float32)
    state = state / jnp.linalg.norm(state)

    probs = jnp.abs(state) ** 2
    easy_scale_coeff = 2 ** (n_qubit - 1)
    gamma, beta, alpha_p = 0.1, 0.6, 0.15
    probs = probs.reshape(dim, 1)
    probs = (beta * jnp.tanh(gamma * easy_scale_coeff * probs)) ** alpha_p
    probs = probs - jnp.mean(probs)
    probs = probs.flatten()[:batch_size].reshape(batch_size, 1, 1)

    # generate_qubit_states_torch (deterministic sample-without-replacement)
    idx = jax.random.permutation(jax.random.fold_in(params["state_key"], 1), dim)[:batch_size]
    bits = ((idx[:, None, None] & (1 << jnp.arange(n_qubit))) > 0).astype(jnp.float32) * 2.0 - 1.0
    combined = jnp.concatenate([bits, probs.astype(jnp.float32)], axis=2)  # [bs, 1, n_qubit+1]

    h = combined
    for (w, b) in params["mapping"]:
        h = h @ w.T + b                              # MappingModel: pure linear chain
    w, b = params["fc1"]
    h = h @ w.T + b                                  # dropout(p=0) is identity
    out = h.reshape(-1)[:weight_length]
    out = out - jnp.mean(out)
    return out


# ----------------------------------------------------------------------------
# Main
# ----------------------------------------------------------------------------
if __name__ == "__main__":
    key = jax.random.PRNGKey(0)
    k_x, k_w0, k_b0, k_hyp = jax.random.split(key, 4)

    # Original conv: Conv2d(4, 8, kernel=3, stride=1, padding=1) with bias.
    N, Cin, H, W = 2, 4, 16, 16
    Cout, kh, kw, pad = 8, 3, 3, 1
    r, alpha = 4, 8

    x = jax.random.normal(k_x, (N, Cin, H, W), jnp.float32)
    bound = 1.0 / math.sqrt(Cin * kh * kw)
    w0 = jax.random.uniform(k_w0, (Cout, Cin, kh, kw), jnp.float32, -bound, bound)
    b0 = jax.random.uniform(k_b0, (Cout,), jnp.float32, -bound, bound)

    vocab_size = Cout * r + r * Cin * kh * kw        # 32 + 144 = 176
    hyp_params, hyp_meta = make_hypernet_params(k_hyp, vocab_size)
    gen_weights = qt_hypernet_forward(hyp_params, hyp_meta)[:vocab_size]

    out = qtlora_conv2d_pallas(x, w0, b0, gen_weights, r=r, alpha=alpha, padding=pad)
    out = jax.block_until_ready(out)

    # Sanity check against a pure-JAX f32 reference (original + LoRA as two convs).
    def ref_conv(xx, ww, bias, p):
        o = jax.lax.conv_general_dilated(
            xx, ww, window_strides=(1, 1), padding=[(p, p), (p, p)],
            dimension_numbers=("NCHW", "OIHW", "NCHW"),
            precision=jax.lax.Precision.HIGHEST)
        if bias is not None:
            o = o + bias.reshape(1, -1, 1, 1)
        return o

    A = gen_weights[:Cout * r].reshape(Cout, r, 1, 1)
    B = gen_weights[Cout * r:].reshape(r, Cin, kh, kw)
    ref = ref_conv(x, w0, b0, pad) + (alpha / r) * ref_conv(ref_conv(x, B, None, pad), A, None, 0)
    assert out.shape == (N, Cout, H, W)
    err = float(jnp.max(jnp.abs(out - ref)))
    assert err < 1e-2, err

    print("KERNEL_OK")
</pallas_src>

<mosaic_0001>
module attributes {stable_mosaic.version = 11 : i64} {
  func.func @_qtlora_conv_kernel(%arg0: i32, %arg1: memref<8x896xf32, #tpu.memory_space<vmem>>, %arg2: memref<9x8x8xf32, #tpu.memory_space<vmem>>, %arg3: memref<8x1xf32, #tpu.memory_space<vmem>>, %arg4: memref<8x768xf32, #tpu.memory_space<vmem>>) attributes {dimension_semantics = [#tpu.dimension_semantics<arbitrary>], iteration_bounds = array<i64: 1>, scalar_prefetch = 0 : i64, scratch_operands = 0 : i64, tpu.core_type = #tpu.core_type<tc>, window_params = [{pipeline_mode = #tpu.pipeline_mode<synchronous>, transform_indices = @transform_0, window_bounds = array<i64: 8, 896>}, {pipeline_mode = #tpu.pipeline_mode<synchronous>, transform_indices = @transform_1, window_bounds = array<i64: 9, 8, 8>}, {pipeline_mode = #tpu.pipeline_mode<synchronous>, transform_indices = @transform_2, window_bounds = array<i64: 8, 1>}, {pipeline_mode = #tpu.pipeline_mode<synchronous>, transform_indices = @transform_3, window_bounds = array<i64: 8, 768>}]} {
    %c0 = arith.constant 0 : index
    %c0_0 = arith.constant 0 : index
    %0 = vector.load %arg1[%c0, %c0_0] : memref<8x896xf32, #tpu.memory_space<vmem>>, vector<8x896xf32>
    %cst = arith.constant 0.000000e+00 : f32
    %1 = vector.broadcast %cst : f32 to vector<8x768xf32>
    %2 = vector.extract_strided_slice %0 {offsets = [0, 0], sizes = [8, 768], strides = [1, 1]} : vector<8x896xf32> to vector<8x768xf32>
    %c0_1 = arith.constant 0 : index
    %c0_2 = arith.constant 0 : index
    %c0_3 = arith.constant 0 : index
    %3 = vector.load %arg2[%c0_1, %c0_2, %c0_3] : memref<9x8x8xf32, #tpu.memory_space<vmem>>, vector<1x8x8xf32>
    %4 = vector.shape_cast %3 : vector<1x8x8xf32> to vector<8x8xf32>
    %cst_4 = arith.constant dense<0.000000e+00> : vector<8x768xf32>
    %5 = tpu.matmul %4, %2, %cst_4 {dimension_numbers = #tpu.dot_dimension_numbers<[1], [0], [0], [1], [0, 0, 1, 1], [], []>} : vector<8x8xf32>, vector<8x768xf32>, vector<8x768xf32> -> vector<8x768xf32>
    %6 = arith.addf %1, %5 : vector<8x768xf32>
    %7 = vector.extract_strided_slice %0 {offsets = [0, 1], sizes = [8, 768], strides = [1, 1]} : vector<8x896xf32> to vector<8x768xf32>
    %c1 = arith.constant 1 : index
    %c0_5 = arith.constant 0 : index
    %c0_6 = arith.constant 0 : index
    %8 = vector.load %arg2[%c1, %c0_5, %c0_6] : memref<9x8x8xf32, #tpu.memory_space<vmem>>, vector<1x8x8xf32>
    %9 = vector.shape_cast %8 : vector<1x8x8xf32> to vector<8x8xf32>
    %cst_7 = arith.constant dense<0.000000e+00> : vector<8x768xf32>
    %10 = tpu.matmul %9, %7, %cst_7 {dimension_numbers = #tpu.dot_dimension_numbers<[1], [0], [0], [1], [0, 0, 1, 1], [], []>} : vector<8x8xf32>, vector<8x768xf32>, vector<8x768xf32> -> vector<8x768xf32>
    %11 = arith.addf %6, %10 : vector<8x768xf32>
    %12 = vector.extract_strided_slice %0 {offsets = [0, 2], sizes = [8, 768], strides = [1, 1]} : vector<8x896xf32> to vector<8x768xf32>
    %c2 = arith.constant 2 : index
    %c0_8 = arith.constant 0 : index
    %c0_9 = arith.constant 0 : index
    %13 = vector.load %arg2[%c2, %c0_8, %c0_9] : memref<9x8x8xf32, #tpu.memory_space<vmem>>, vector<1x8x8xf32>
    %14 = vector.shape_cast %13 : vector<1x8x8xf32> to vector<8x8xf32>
    %cst_10 = arith.constant dense<0.000000e+00> : vector<8x768xf32>
    %15 = tpu.matmul %14, %12, %cst_10 {dimension_numbers = #tpu.dot_dimension_numbers<[1], [0], [0], [1], [0, 0, 1, 1], [], []>} : vector<8x8xf32>, vector<8x768xf32>, vector<8x768xf32> -> vector<8x768xf32>
    %16 = arith.addf %11, %15 : vector<8x768xf32>
    %17 = vector.extract_strided_slice %0 {offsets = [0, 18], sizes = [8, 768], strides = [1, 1]} : vector<8x896xf32> to vector<8x768xf32>
    %c3 = arith.constant 3 : index
    %c0_11 = arith.constant 0 : index
    %c0_12 = arith.constant 0 : index
    %18 = vector.load %arg2[%c3, %c0_11, %c0_12] : memref<9x8x8xf32, #tpu.memory_space<vmem>>, vector<1x8x8xf32>
    %19 = vector.shape_cast %18 : vector<1x8x8xf32> to vector<8x8xf32>
    %cst_13 = arith.constant dense<0.000000e+00> : vector<8x768xf32>
    %20 = tpu.matmul %19, %17, %cst_13 {dimension_numbers = #tpu.dot_dimension_numbers<[1], [0], [0], [1], [0, 0, 1, 1], [], []>} : vector<8x8xf32>, vector<8x768xf32>, vector<8x768xf32> -> vector<8x768xf32>
    %21 = arith.addf %16, %20 : vector<8x768xf32>
    %22 = vector.extract_strided_slice %0 {offsets = [0, 19], sizes = [8, 768], strides = [1, 1]} : vector<8x896xf32> to vector<8x768xf32>
    %c4 = arith.constant 4 : index
    %c0_14 = arith.constant 0 : index
    %c0_15 = arith.constant 0 : index
    %23 = vector.load %arg2[%c4, %c0_14, %c0_15] : memref<9x8x8xf32, #tpu.memory_space<vmem>>, vector<1x8x8xf32>
    %24 = vector.shape_cast %23 : vector<1x8x8xf32> to vector<8x8xf32>
    %cst_16 = arith.constant dense<0.000000e+00> : vector<8x768xf32>
    %25 = tpu.matmul %24, %22, %cst_16 {dimension_numbers = #tpu.dot_dimension_numbers<[1], [0], [0], [1], [0, 0, 1, 1], [], []>} : vector<8x8xf32>, vector<8x768xf32>, vector<8x768xf32> -> vector<8x768xf32>
    %26 = arith.addf %21, %25 : vector<8x768xf32>
    %27 = vector.extract_strided_slice %0 {offsets = [0, 20], sizes = [8, 768], strides = [1, 1]} : vector<8x896xf32> to vector<8x768xf32>
    %c5 = arith.constant 5 : index
    %c0_17 = arith.constant 0 : index
    %c0_18 = arith.constant 0 : index
    %28 = vector.load %arg2[%c5, %c0_17, %c0_18] : memref<9x8x8xf32, #tpu.memory_space<vmem>>, vector<1x8x8xf32>
    %29 = vector.shape_cast %28 : vector<1x8x8xf32> to vector<8x8xf32>
    %cst_19 = arith.constant dense<0.000000e+00> : vector<8x768xf32>
    %30 = tpu.matmul %29, %27, %cst_19 {dimension_numbers = #tpu.dot_dimension_numbers<[1], [0], [0], [1], [0, 0, 1, 1], [], []>} : vector<8x8xf32>, vector<8x768xf32>, vector<8x768xf32> -> vector<8x768xf32>
    %31 = arith.addf %26, %30 : vector<8x768xf32>
    %32 = vector.extract_strided_slice %0 {offsets = [0, 36], sizes = [8, 768], strides = [1, 1]} : vector<8x896xf32> to vector<8x768xf32>
    %c6 = arith.constant 6 : index
    %c0_20 = arith.constant 0 : index
    %c0_21 = arith.constant 0 : index
    %33 = vector.load %arg2[%c6, %c0_20, %c0_21] : memref<9x8x8xf32, #tpu.memory_space<vmem>>, vector<1x8x8xf32>
    %34 = vector.shape_cast %33 : vector<1x8x8xf32> to vector<8x8xf32>
    %cst_22 = arith.constant dense<0.000000e+00> : vector<8x768xf32>
    %35 = tpu.matmul %34, %32, %cst_22 {dimension_numbers = #tpu.dot_dimension_numbers<[1], [0], [0], [1], [0, 0, 1, 1], [], []>} : vector<8x8xf32>, vector<8x768xf32>, vector<8x768xf32> -> vector<8x768xf32>
    %36 = arith.addf %31, %35 : vector<8x768xf32>
    %37 = vector.extract_strided_slice %0 {offsets = [0, 37], sizes = [8, 768], strides = [1, 1]} : vector<8x896xf32> to vector<8x768xf32>
    %c7 = arith.constant 7 : index
    %c0_23 = arith.constant 0 : index
    %c0_24 = arith.constant 0 : index
    %38 = vector.load %arg2[%c7, %c0_23, %c0_24] : memref<9x8x8xf32, #tpu.memory_space<vmem>>, vector<1x8x8xf32>
    %39 = vector.shape_cast %38 : vector<1x8x8xf32> to vector<8x8xf32>
    %cst_25 = arith.constant dense<0.000000e+00> : vector<8x768xf32>
    %40 = tpu.matmul %39, %37, %cst_25 {dimension_numbers = #tpu.dot_dimension_numbers<[1], [0], [0], [1], [0, 0, 1, 1], [], []>} : vector<8x8xf32>, vector<8x768xf32>, vector<8x768xf32> -> vector<8x768xf32>
    %41 = arith.addf %36, %40 : vector<8x768xf32>
    %42 = vector.extract_strided_slice %0 {offsets = [0, 38], sizes = [8, 768], strides = [1, 1]} : vector<8x896xf32> to vector<8x768xf32>
    %c8 = arith.constant 8 : index
    %c0_26 = arith.constant 0 : index
    %c0_27 = arith.constant 0 : index
    %43 = vector.load %arg2[%c8, %c0_26, %c0_27] : memref<9x8x8xf32, #tpu.memory_space<vmem>>, vector<1x8x8xf32>
    %44 = vector.shape_cast %43 : vector<1x8x8xf32> to vector<8x8xf32>
    %cst_28 = arith.constant dense<0.000000e+00> : vector<8x768xf32>
    %45 = tpu.matmul %44, %42, %cst_28 {dimension_numbers = #tpu.dot_dimension_numbers<[1], [0], [0], [1], [0, 0, 1, 1], [], []>} : vector<8x8xf32>, vector<8x768xf32>, vector<8x768xf32> -> vector<8x768xf32>
    %46 = arith.addf %41, %45 : vector<8x768xf32>
    %c0_29 = arith.constant 0 : index
    %c0_30 = arith.constant 0 : index
    %47 = vector.load %arg3[%c0_29, %c0_30] : memref<8x1xf32, #tpu.memory_space<vmem>>, vector<8x1xf32>
    %48 = vector.broadcast %47 : vector<8x1xf32> to vector<8x768xf32>
    %49 = arith.addf %46, %48 : vector<8x768xf32>
    %c0_31 = arith.constant 0 : index
    %c0_32 = arith.constant 0 : index
    %50 = vector.load %arg4[%c0_31, %c0_32] : memref<8x768xf32, #tpu.memory_space<vmem>>, vector<8x768xf32>
    tpu.vector_store %arg4[%c0_31, %c0_32], %49 {strides = array<i32>} : memref<8x768xf32, #tpu.memory_space<vmem>>, vector<8x768xf32>,
    return
  }
  func.func @transform_0(%arg0: i32) -> (i32, i32) {
    %c0_i32 = arith.constant 0 : i32
    %c0_i32_0 = arith.constant 0 : i32
    %c0_i32_1 = arith.constant 0 : i32
    return %c0_i32, %c0_i32_0 : i32, i32
  }
  func.func @transform_1(%arg0: i32) -> (i32, i32, i32) {
    %c0_i32 = arith.constant 0 : i32
    %c0_i32_0 = arith.constant 0 : i32
    %c0_i32_1 = arith.constant 0 : i32
    %c0_i32_2 = arith.constant 0 : i32
    return %c0_i32, %c0_i32_0, %c0_i32_1 : i32, i32, i32
  }
  func.func @transform_2(%arg0: i32) -> (i32, i32) {
    %c0_i32 = arith.constant 0 : i32
    %c0_i32_0 = arith.constant 0 : i32
    %c0_i32_1 = arith.constant 0 : i32
    return %c0_i32, %c0_i32_0 : i32, i32
  }
  func.func @transform_3(%arg0: i32) -> (i32, i32) {
    %c0_i32 = arith.constant 0 : i32
    %c0_i32_0 = arith.constant 0 : i32
    %c0_i32_1 = arith.constant 0 : i32
    return %c0_i32, %c0_i32_0 : i32, i32
  }
}

</mosaic_0001>

<llo_original>
// kernel: tpu_custom_call.1
$region0: #{tpu_custom_call.1}
  #allocation0 [shape = 'u32[]', space=smem, size = 0x4, offset = 0x4, fixed_abs, tag = 'smem constant byte address 0x4 - core index']
  #allocation1 [shape = 'u32[144,128]{1,0:T(1,128)}', space=vmem, size = 0x12000, scoped, tag = 'internal scratch']
  %s0 = inlined_call_operand.vmem [shape: f32[8,896], index: 0, kind: input, shape index: {}]
  %s1 = inlined_call_operand.vmem [shape: f32[9,8,8], index: 1, kind: input, shape index: {}]
  %s2 = inlined_call_operand.vmem [shape: f32[8,1], index: 2, kind: input, shape index: {}]
  %s3 = inlined_call_operand.hbm [shape: f32[8,768], index: 3, kind: output, shape index: {}]
  %s4 = sld [smem:[#allocation0]]
  $region22: #{tpu_custom_call.1} parent=0
    _
  %s6 = ssub.s32 1, %s4
  %s7 = scalar_select 0, %s6, %s4
  $region1: #{tpu_custom_call.1} parent=0
    #allocation2 [shape = 'u8[24576]{0}', space=vmem, size = 0x6000, scoped, tag = 'output window, operand 0, single buffered']
    #allocation3 [shape = 's32[1]{0}', space=sflag, size = 0x4, scoped, tag = 'scoped memory for tpu_custom_call.1']
    %8 = vsyncpa [#allocation3], 0
    // Predicated region
    $region2: #{tpu_custom_call.1} parent=1 // pred_check
      _
    $region3: #{tpu_custom_call.1} parent=1 // pred_check_branch
      %10 = sbr.rel (0) target = $region5
    $region4: #{tpu_custom_call.1} parent=1 // pred_region
      _
    $region5: #{tpu_custom_call.1} parent=1 // pred_fallthru
      _
    // Predicated region
    $region6: #{tpu_custom_call.1} parent=1 // pred_check
      _
    $region7: #{tpu_custom_call.1} parent=1 // pred_check_branch
      %12 = sbr.rel (0) target = $region9
    $region8: #{tpu_custom_call.1} parent=1 // pred_region
      _
    $region9: #{tpu_custom_call.1} parent=1 // pred_fallthru
      _
    // Predicated region
    $region10: #{tpu_custom_call.1} parent=1 // pred_check
      _
    $region11: #{tpu_custom_call.1} parent=1 // pred_check_branch
      %14 = sbr.rel (0) target = $region13
    $region12: #{tpu_custom_call.1} parent=1 // pred_region
      _
    $region13: #{tpu_custom_call.1} parent=1 // pred_fallthru
      _
    %v15 = vld [vmem:[%s0] sm:$0xff]
    %v16 = vld [vmem:[%s0 + $0x8] sm:$0xff]
    %v17 = vld [vmem:[%s0 + $0x10] sm:$0xff]
    %v18 = vld [vmem:[%s0 + $0x18] sm:$0xff]
    %v19 = vld [vmem:[%s0 + $0x20] sm:$0xff]
    %v20 = vld [vmem:[%s0 + $0x28] sm:$0xff]
    %v21 = vld [vmem:[%s0 + $0x30] sm:$0xff]
    %v22 = vld [vmem:[%s1] sm:$0xff]
    %s23 = scalar_lea.vmem %s1, 8
    %v24 = vld [vmem:[%s23] sm:$0xff]
    %32 = vrot.lane.b32.xlu0 %v15, 127
    %v33 = vpop.permute.xlu0 %32
    %34 = vrot.lane.b32.xlu0 %v16, 127
    %v35 = vpop.permute.xlu0 %34
    %36 = vrot.lane.b32.xlu0 %v17, 127
    %v37 = vpop.permute.xlu0 %36
    %38 = vrot.lane.b32.xlu0 %v18, 127
    %v39 = vpop.permute.xlu0 %38
    %40 = vrot.lane.b32.xlu0 %v19, 127
    %v41 = vpop.permute.xlu0 %40
    %42 = vrot.lane.b32.xlu0 %v20, 127
    %v43 = vpop.permute.xlu0 %42
    %44 = vrot.lane.b32.xlu0 %v21, 127
    %v45 = vpop.permute.xlu0 %44
    %vm46 = vcmask 1039360
    %v47 = vsel %vm46, %v33, %v35
    %v48 = vsel %vm46, %v35, %v37
    %v49 = vsel %vm46, %v37, %v39
    %v50 = vsel %vm46, %v39, %v41
    %v51 = vsel %vm46, %v41, %v43
    %v52 = vsel %vm46, %v43, %v45
    %vm59 = vcmask 64512
    %v61 = vsel %vm59, %v24, 0
    %63 = vmatprep.subr.mxu0 %v48
    %64 = vmatpush1.msra.mxu0 %v47
    %65 = vmatprep.subr.mxu0 0.0
    %66 = vmatpush1.msra.mxu0 0.0
    %67 = vmatprep.subr.mxu0 0.0
    %68 = vmatpush1.msra.mxu0 0.0
    %69 = vmatprep.subr.mxu0 0.0
    %70 = vmatpush1.msra.mxu0 0.0
    %71 = vmatprep.subr.mxu0 0.0
    %72 = vmatpush1.msra.mxu0 0.0
    %73 = vmatprep.subr.mxu0 0.0
    %74 = vmatpush1.msra.mxu0 0.0
    %75 = vmatprep.subr.mxu0 0.0
    %76 = vmatpush1.msra.mxu0 0.0
    %77 = vmatprep.subr.mxu0 0.0
    %78 = vmatpush1.msra.mxu0 0.0
    %79 = vmatprep.subr.mxu0 0.0
    %80 = vmatpush1.msra.mxu0 0.0
    %81 = vmatprep.subr.mxu0 0.0
    %82 = vmatpush1.msra.mxu0 0.0
    %83 = vmatprep.subr.mxu0 0.0
    %84 = vmatpush1.msra.mxu0 0.0
    %85 = vmatprep.subr.mxu0 0.0
    %86 = vmatpush1.msra.mxu0 0.0
    %87 = vmatprep.subr.mxu0 0.0
    %88 = vmatpush1.msra.mxu0 0.0
    %89 = vmatprep.subr.mxu0 0.0
    %90 = vmatpush1.msra.mxu0 0.0
    %91 = vmatprep.subr.mxu0 0.0
    %92 = vmatpush1.msra.mxu0 0.0
    %93 = vmatprep.subr.mxu0 0.0
    %94 = vmatpush1.msra.mxu0 0.0
    %95 = vmatprep.subr.mxu0 0.0
    %96 = vmatpush1.msra.mxu0 0.0
    %97 = vmatprep.subr.mxu0 0.0
    %98 = vmatpush1.msra.mxu0 0.0
    %99 = vmatprep.subr.mxu0 0.0
    %100 = vmatpush1.msra.mxu0 0.0
    %101 = vmatprep.subr.mxu0 0.0
    %102 = vmatpush1.msra.mxu0 0.0
    %103 = vmatprep.subr.mxu0 0.0
    %104 = vmatpush1.msra.mxu0 0.0
    %105 = vmatprep.subr.mxu0 0.0
    %106 = vmatpush1.msra.mxu0 0.0
    %107 = vmatprep.subr.mxu0 0.0
    %108 = vmatpush1.msra.mxu0 0.0
    %109 = vmatprep.subr.mxu0 0.0
    %110 = vmatpush1.msra.mxu0 0.0
    %111 = vmatprep.subr.mxu0 0.0
    %112 = vmatpush1.msra.mxu0 0.0
    %113 = vmatprep.subr.mxu0 0.0
    %114 = vmatpush1.msra.mxu0 0.0
    %115 = vmatprep.subr.mxu0 0.0
    %116 = vmatpush1.msra.mxu0 0.0
    %117 = vmatprep.subr.mxu0 0.0
    %118 = vmatpush1.msra.mxu0 0.0
    %119 = vmatprep.subr.mxu0 0.0
    %120 = vmatpush1.msra.mxu0 0.0
    %121 = vmatprep.subr.mxu0 0.0
    %122 = vmatpush1.msra.mxu0 0.0
    %123 = vmatprep.subr.mxu0 0.0
    %124 = vmatpush1.msra.mxu0 0.0
    %125 = vmatprep.subr.mxu0 0.0
    %126 = vmatpush1.msra.mxu0 0.0
    %127 = vmatprep.mubr.f32.mxu0 0.0
    %128 = vmatmul.mubr.f32.gmra.mrb[0].mxu0 %v61
    %v129 = vpop.f32.mrb[0].mxu0
    %v130 = vadd.f32 0.0, %v129
    %v131 = vpop.f32.mrb[0].mxu0
    %v132 = vadd.f32 0.0, %v131
    %133 = vdwg.mxu0
    %134 = vmatprep.subr.mxu0 %v50
    %135 = vmatpush1.msra.mxu0 %v49
    %136 = vmatprep.subr.mxu0 0.0
    %137 = vmatpush1.msra.mxu0 0.0
    %138 = vmatprep.subr.mxu0 0.0
    %139 = vmatpush1.msra.mxu0 0.0
    %140 = vmatprep.subr.mxu0 0.0
    %141 = vmatpush1.msra.mxu0 0.0
    %142 = vmatprep.subr.mxu0 0.0
    %143 = vmatpush1.msra.mxu0 0.0
    %144 = vmatprep.subr.mxu0 0.0
    %145 = vmatpush1.msra.mxu0 0.0
    %146 = vmatprep.subr.mxu0 0.0
    %147 = vmatpush1.msra.mxu0 0.0
    %148 = vmatprep.subr.mxu0 0.0
    %149 = vmatpush1.msra.mxu0 0.0
    %150 = vmatprep.subr.mxu0 0.0
    %151 = vmatpush1.msra.mxu0 0.0
    %152 = vmatprep.subr.mxu0 0.0
    %153 = vmatpush1.msra.mxu0 0.0
    %154 = vmatprep.subr.mxu0 0.0
    %155 = vmatpush1.msra.mxu0 0.0
    %156 = vmatprep.subr.mxu0 0.0
    %157 = vmatpush1.msra.mxu0 0.0
    %158 = vmatprep.subr.mxu0 0.0
    %159 = vmatpush1.msra.mxu0 0.0
    %160 = vmatprep.subr.mxu0 0.0
    %161 = vmatpush1.msra.mxu0 0.0
    %162 = vmatprep.subr.mxu0 0.0
    %163 = vmatpush1.msra.mxu0 0.0
    %164 = vmatprep.subr.mxu0 0.0
    %165 = vmatpush1.msra.mxu0 0.0
    %166 = vmatprep.subr.mxu0 0.0
    %167 = vmatpush1.msra.mxu0 0.0
    %168 = vmatprep.subr.mxu0 0.0
    %169 = vmatpush1.msra.mxu0 0.0
    %170 = vmatprep.subr.mxu0 0.0
    %171 = vmatpush1.msra.mxu0 0.0
    %172 = vmatprep.subr.mxu0 0.0
    %173 = vmatpush1.msra.mxu0 0.0
    %174 = vmatprep.subr.mxu0 0.0
    %175 = vmatpush1.msra.mxu0 0.0
    %176 = vmatprep.subr.mxu0 0.0
    %177 = vmatpush1.msra.mxu0 0.0
    %178 = vmatprep.subr.mxu0 0.0
    %179 = vmatpush1.msra.mxu0 0.0
    %180 = vmatprep.subr.mxu0 0.0
    %181 = vmatpush1.msra.mxu0 0.0
    %182 = vmatprep.subr.mxu0 0.0
    %183 = vmatpush1.msra.mxu0 0.0
    %184 = vmatprep.subr.mxu0 0.0
    %185 = vmatpush1.msra.mxu0 0.0
    %186 = vmatprep.subr.mxu0 0.0
    %187 = vmatpush1.msra.mxu0 0.0
    %188 = vmatprep.subr.mxu0 0.0
    %189 = vmatpush1.msra.mxu0 0.0
    %190 = vmatprep.subr.mxu0 0.0
    %191 = vmatpush1.msra.mxu0 0.0
    %192 = vmatprep.subr.mxu0 0.0
    %193 = vmatpush1.msra.mxu0 0.0
    %194 = vmatprep.subr.mxu0 0.0
    %195 = vmatpush1.msra.mxu0 0.0
    %196 = vmatprep.subr.mxu0 0.0
    %197 = vmatpush1.msra.mxu0 0.0
    %198 = vmatprep.mubr.f32.mxu0 0.0
    %199 = vmatmul.mubr.f32.gmra.mrb[0].mxu0 %v61
    %v200 = vpop.f32.mrb[0].mxu0
    %v201 = vadd.f32 0.0, %v200
    %v202 = vpop.f32.mrb[0].mxu0
    %v203 = vadd.f32 0.0, %v202
    %204 = vdwg.mxu0
    %205 = vmatprep.subr.mxu0 %v52
    %206 = vmatpush1.msra.mxu0 %v51
    %207 = vmatprep.subr.mxu0 0.0
    %208 = vmatpush1.msra.mxu0 0.0
    %209 = vmatprep.subr.mxu0 0.0
    %210 = vmatpush1.msra.mxu0 0.0
    %211 = vmatprep.subr.mxu0 0.0
    %212 = vmatpush1.msra.mxu0 0.0
    %213 = vmatprep.subr.mxu0 0.0
    %214 = vmatpush1.msra.mxu0 0.0
    %215 = vmatprep.subr.mxu0 0.0
    %216 = vmatpush1.msra.mxu0 0.0
    %217 = vmatprep.subr.mxu0 0.0
    %218 = vmatpush1.msra.mxu0 0.0
    %219 = vmatprep.subr.mxu0 0.0
    %220 = vmatpush1.msra.mxu0 0.0
    %221 = vmatprep.subr.mxu0 0.0
    %222 = vmatpush1.msra.mxu0 0.0
    %223 = vmatprep.subr.mxu0 0.0
    %224 = vmatpush1.msra.mxu0 0.0
    %225 = vmatprep.subr.mxu0 0.0
    %226 = vmatpush1.msra.mxu0 0.0
    %227 = vmatprep.subr.mxu0 0.0
    %228 = vmatpush1.msra.mxu0 0.0
    %229 = vmatprep.subr.mxu0 0.0
    %230 = vmatpush1.msra.mxu0 0.0
    %231 = vmatprep.subr.mxu0 0.0
    %232 = vmatpush1.msra.mxu0 0.0
    %233 = vmatprep.subr.mxu0 0.0
    %234 = vmatpush1.msra.mxu0 0.0
    %235 = vmatprep.subr.mxu0 0.0
    %236 = vmatpush1.msra.mxu0 0.0
    %237 = vmatprep.subr.mxu0 0.0
    %238 = vmatpush1.msra.mxu0 0.0
    %239 = vmatprep.subr.mxu0 0.0
    %240 = vmatpush1.msra.mxu0 0.0
    %241 = vmatprep.subr.mxu0 0.0
    %242 = vmatpush1.msra.mxu0 0.0
    %243 = vmatprep.subr.mxu0 0.0
    %244 = vmatpush1.msra.mxu0 0.0
    %245 = vmatprep.subr.mxu0 0.0
    %246 = vmatpush1.msra.mxu0 0.0
    %247 = vmatprep.subr.mxu0 0.0
    %248 = vmatpush1.msra.mxu0 0.0
    %249 = vmatprep.subr.mxu0 0.0
    %250 = vmatpush1.msra.mxu0 0.0
    %251 = vmatprep.subr.mxu0 0.0
    %252 = vmatpush1.msra.mxu0 0.0
    %253 = vmatprep.subr.mxu0 0.0
    %254 = vmatpush1.msra.mxu0 0.0
    %255 = vmatprep.subr.mxu0 0.0
    %256 = vmatpush1.msra.mxu0 0.0
    %257 = vmatprep.subr.mxu0 0.0
    %258 = vmatpush1.msra.mxu0 0.0
    %259 = vmatprep.subr.mxu0 0.0
    %260 = vmatpush1.msra.mxu0 0.0
    %261 = vmatprep.subr.mxu0 0.0
    %262 = vmatpush1.msra.mxu0 0.0
    %263 = vmatprep.subr.mxu0 0.0
    %264 = vmatpush1.msra.mxu0 0.0
    %265 = vmatprep.subr.mxu0 0.0
    %266 = vmatpush1.msra.mxu0 0.0
    %267 = vmatprep.subr.mxu0 0.0
    %268 = vmatpush1.msra.mxu0 0.0
    %269 = vmatprep.mubr.f32.mxu0 0.0
    %270 = vmatmul.mubr.f32.gmra.mrb[0].mxu0 %v61
    %v271 = vpop.f32.mrb[0].mxu0
    %v272 = vadd.f32 0.0, %v271
    %v273 = vpop.f32.mrb[0].mxu0
    %v274 = vadd.f32 0.0, %v273
    %275 = vdwg.mxu0
    %v277 = vsel %vm59, %v22, 0
    %279 = vmatprep.subr.mxu0 %v16
    %280 = vmatpush1.msra.mxu0 %v15
    %281 = vmatprep.subr.mxu0 0.0
    %282 = vmatpush1.msra.mxu0 0.0
    %283 = vmatprep.subr.mxu0 0.0
    %284 = vmatpush1.msra.mxu0 0.0
    %285 = vmatprep.subr.mxu0 0.0
    %286 = vmatpush1.msra.mxu0 0.0
    %287 = vmatprep.subr.mxu0 0.0
    %288 = vmatpush1.msra.mxu0 0.0
    %289 = vmatprep.subr.mxu0 0.0
    %290 = vmatpush1.msra.mxu0 0.0
    %291 = vmatprep.subr.mxu0 0.0
    %292 = vmatpush1.msra.mxu0 0.0
    %293 = vmatprep.subr.mxu0 0.0
    %294 = vmatpush1.msra.mxu0 0.0
    %295 = vmatprep.subr.mxu0 0.0
    %296 = vmatpush1.msra.mxu0 0.0
    %297 = vmatprep.subr.mxu0 0.0
    %298 = vmatpush1.msra.mxu0 0.0
    %299 = vmatprep.subr.mxu0 0.0
    %300 = vmatpush1.msra.mxu0 0.0
    %301 = vmatprep.subr.mxu0 0.0
    %302 = vmatpush1.msra.mxu0 0.0
    %303 = vmatprep.subr.mxu0 0.0
    %304 = vmatpush1.msra.mxu0 0.0
    %305 = vmatprep.subr.mxu0 0.0
    %306 = vmatpush1.msra.mxu0 0.0
    %307 = vmatprep.subr.mxu0 0.0
    %308 = vmatpush1.msra.mxu0 0.0
    %309 = vmatprep.subr.mxu0 0.0
    %310 = vmatpush1.msra.mxu0 0.0
    %311 = vmatprep.subr.mxu0 0.0
    %312 = vmatpush1.msra.mxu0 0.0
    %313 = vmatprep.subr.mxu0 0.0
    %314 = vmatpush1.msra.mxu0 0.0
    %315 = vmatprep.subr.mxu0 0.0
    %316 = vmatpush1.msra.mxu0 0.0
    %317 = vmatprep.subr.mxu0 0.0
    %318 = vmatpush1.msra.mxu0 0.0
    %319 = vmatprep.subr.mxu0 0.0
    %320 = vmatpush1.msra.mxu0 0.0
    %321 = vmatprep.subr.mxu0 0.0
    %322 = vmatpush1.msra.mxu0 0.0
    %323 = vmatprep.subr.mxu0 0.0
    %324 = vmatpush1.msra.mxu0 0.0
    %325 = vmatprep.subr.mxu0 0.0
    %326 = vmatpush1.msra.mxu0 0.0
    %327 = vmatprep.subr.mxu0 0.0
    %328 = vmatpush1.msra.mxu0 0.0
    %329 = vmatprep.subr.mxu0 0.0
    %330 = vmatpush1.msra.mxu0 0.0
    %331 = vmatprep.subr.mxu0 0.0
    %332 = vmatpush1.msra.mxu0 0.0
    %333 = vmatprep.subr.mxu0 0.0
    %334 = vmatpush1.msra.mxu0 0.0
    %335 = vmatprep.subr.mxu0 0.0
    %336 = vmatpush1.msra.mxu0 0.0
    %337 = vmatprep.subr.mxu0 0.0
    %338 = vmatpush1.msra.mxu0 0.0
    %339 = vmatprep.subr.mxu0 0.0
    %340 = vmatpush1.msra.mxu0 0.0
    %341 = vmatprep.subr.mxu0 0.0
    %342 = vmatpush1.msra.mxu0 0.0
    %343 = vmatprep.mubr.f32.mxu0 0.0
    %344 = vmatmul.mubr.f32.gmra.mrb[0].mxu0 %v277
    %v345 = vpop.f32.mrb[0].mxu0
    %v346 = vadd.f32 %v130, %v345
    %v347 = vpop.f32.mrb[0].mxu0
    %v348 = vadd.f32 %v132, %v347
    %349 = vdwg.mxu0
    %350 = vmatprep.subr.mxu0 %v18
    %351 = vmatpush1.msra.mxu0 %v17
    %352 = vmatprep.subr.mxu0 0.0
    %353 = vmatpush1.msra.mxu0 0.0
    %354 = vmatprep.subr.mxu0 0.0
    %355 = vmatpush1.msra.mxu0 0.0
    %356 = vmatprep.subr.mxu0 0.0
    %357 = vmatpush1.msra.mxu0 0.0
    %358 = vmatprep.subr.mxu0 0.0
    %359 = vmatpush1.msra.mxu0 0.0
    %360 = vmatprep.subr.mxu0 0.0
    %361 = vmatpush1.msra.mxu0 0.0
    %362 = vmatprep.subr.mxu0 0.0
    %363 = vmatpush1.msra.mxu0 0.0
    %364 = vmatprep.subr.mxu0 0.0
    %365 = vmatpush1.msra.mxu0 0.0
    %366 = vmatprep.subr.mxu0 0.0
    %367 = vmatpush1.msra.mxu0 0.0
    %368 = vmatprep.subr.mxu0 0.0
    %369 = vmatpush1.msra.mxu0 0.0
    %370 = vmatprep.subr.mxu0 0.0
    %371 = vmatpush1.msra.mxu0 0.0
    %372 = vmatprep.subr.mxu0 0.0
    %373 = vmatpush1.msra.mxu0 0.0
    %374 = vmatprep.subr.mxu0 0.0
    %375 = vmatpush1.msra.mxu0 0.0
    %376 = vmatprep.subr.mxu0 0.0
    %377 = vmatpush1.msra.mxu0 0.0
    %378 = vmatprep.subr.mxu0 0.0
    %379 = vmatpush1.msra.mxu0 0.0
    %380 = vmatprep.subr.mxu0 0.0
    %381 = vmatpush1.msra.mxu0 0.0
    %382 = vmatprep.subr.mxu0 0.0
    %383 = vmatpush1.msra.mxu0 0.0
    %384 = vmatprep.subr.mxu0 0.0
    %385 = vmatpush1.msra.mxu0 0.0
    %386 = vmatprep.subr.mxu0 0.0
    %387 = vmatpush1.msra.mxu0 0.0
    %388 = vmatprep.subr.mxu0 0.0
    %389 = vmatpush1.msra.mxu0 0.0
    %390 = vmatprep.subr.mxu0 0.0
    %391 = vmatpush1.msra.mxu0 0.0
    %392 = vmatprep.subr.mxu0 0.0
    %393 = vmatpush1.msra.mxu0 0.0
    %394 = vmatprep.subr.mxu0 0.0
    %395 = vmatpush1.msra.mxu0 0.0
    %396 = vmatprep.subr.mxu0 0.0
    %397 = vmatpush1.msra.mxu0 0.0
    %398 = vmatprep.subr.mxu0 0.0
    %399 = vmatpush1.msra.mxu0 0.0
    %400 = vmatprep.subr.mxu0 0.0
    %401 = vmatpush1.msra.mxu0 0.0
    %402 = vmatprep.subr.mxu0 0.0
    %403 = vmatpush1.msra.mxu0 0.0
    %404 = vmatprep.subr.mxu0 0.0
    %405 = vmatpush1.msra.mxu0 0.0
    %406 = vmatprep.subr.mxu0 0.0
    %407 = vmatpush1.msra.mxu0 0.0
    %408 = vmatprep.subr.mxu0 0.0
    %409 = vmatpush1.msra.mxu0 0.0
    %410 = vmatprep.subr.mxu0 0.0
    %411 = vmatpush1.msra.mxu0 0.0
    %412 = vmatprep.subr.mxu0 0.0
    %413 = vmatpush1.msra.mxu0 0.0
    %414 = vmatprep.mubr.f32.mxu0 0.0
    %415 = vmatmul.mubr.f32.gmra.mrb[0].mxu0 %v277
    %v416 = vpop.f32.mrb[0].mxu0
    %v417 = vadd.f32 %v201, %v416
    %v418 = vpop.f32.mrb[0].mxu0
    %v419 = vadd.f32 %v203, %v418
    %420 = vdwg.mxu0
    %421 = vmatprep.subr.mxu0 %v20
    %422 = vmatpush1.msra.mxu0 %v19
    %423 = vmatprep.subr.mxu0 0.0
    %424 = vmatpush1.msra.mxu0 0.0
    %425 = vmatprep.subr.mxu0 0.0
    %426 = vmatpush1.msra.mxu0 0.0
    %427 = vmatprep.subr.mxu0 0.0
    %428 = vmatpush1.msra.mxu0 0.0
    %429 = vmatprep.subr.mxu0 0.0
    %430 = vmatpush1.msra.mxu0 0.0
    %431 = vmatprep.subr.mxu0 0.0
    %432 = vmatpush1.msra.mxu0 0.0
    %433 = vmatprep.subr.mxu0 0.0
    %434 = vmatpush1.msra.mxu0 0.0
    %435 = vmatprep.subr.mxu0 0.0
    %436 = vmatpush1.msra.mxu0 0.0
    %437 = vmatprep.subr.mxu0 0.0
    %438 = vmatpush1.msra.mxu0 0.0
    %439 = vmatprep.subr.mxu0 0.0
    %440 = vmatpush1.msra.mxu0 0.0
    %441 = vmatprep.subr.mxu0 0.0
    %442 = vmatpush1.msra.mxu0 0.0
    %443 = vmatprep.subr.mxu0 0.0
    %444 = vmatpush1.msra.mxu0 0.0
    %445 = vmatprep.subr.mxu0 0.0
    %446 = vmatpush1.msra.mxu0 0.0
    %447 = vmatprep.subr.mxu0 0.0
    %448 = vmatpush1.msra.mxu0 0.0
    %449 = vmatprep.subr.mxu0 0.0
    %450 = vmatpush1.msra.mxu0 0.0
    %451 = vmatprep.subr.mxu0 0.0
    %452 = vmatpush1.msra.mxu0 0.0
    %453 = vmatprep.subr.mxu0 0.0
    %454 = vmatpush1.msra.mxu0 0.0
    %455 = vmatprep.subr.mxu0 0.0
    %456 = vmatpush1.msra.mxu0 0.0
    %457 = vmatprep.subr.mxu0 0.0
    %458 = vmatpush1.msra.mxu0 0.0
    %459 = vmatprep.subr.mxu0 0.0
    %460 = vmatpush1.msra.mxu0 0.0
    %461 = vmatprep.subr.mxu0 0.0
    %462 = vmatpush1.msra.mxu0 0.0
    %463 = vmatprep.subr.mxu0 0.0
    %464 = vmatpush1.msra.mxu0 0.0
    %465 = vmatprep.subr.mxu0 0.0
    %466 = vmatpush1.msra.mxu0 0.0
    %467 = vmatprep.subr.mxu0 0.0
    %468 = vmatpush1.msra.mxu0 0.0
    %469 = vmatprep.subr.mxu0 0.0
    %470 = vmatpush1.msra.mxu0 0.0
    %471 = vmatprep.subr.mxu0 0.0
    %472 = vmatpush1.msra.mxu0 0.0
    %473 = vmatprep.subr.mxu0 0.0
    %474 = vmatpush1.msra.mxu0 0.0
    %475 = vmatprep.subr.mxu0 0.0
    %476 = vmatpush1.msra.mxu0 0.0
    %477 = vmatprep.subr.mxu0 0.0
    %478 = vmatpush1.msra.mxu0 0.0
    %479 = vmatprep.subr.mxu0 0.0
    %480 = vmatpush1.msra.mxu0 0.0
    %481 = vmatprep.subr.mxu0 0.0
    %482 = vmatpush1.msra.mxu0 0.0
    %483 = vmatprep.subr.mxu0 0.0
    %484 = vmatpush1.msra.mxu0 0.0
    %485 = vmatprep.mubr.f32.mxu0 0.0
    %486 = vmatmul.mubr.f32.gmra.mrb[0].mxu0 %v277
    %v487 = vpop.f32.mrb[0].mxu0
    %v488 = vadd.f32 %v272, %v487
    %v489 = vpop.f32.mrb[0].mxu0
    %v490 = vadd.f32 %v274, %v489
    %491 = vdwg.mxu0
    %s492 = scalar_lea.vmem %s1, 16
    %v493 = vld [vmem:[%s492] sm:$0xff]
    %494 = vrot.lane.b32.xlu0 %v15, 126
    %v495 = vpop.permute.xlu0 %494
    %496 = vrot.lane.b32.xlu0 %v16, 126
    %v497 = vpop.permute.xlu0 %496
    %498 = vrot.lane.b32.xlu0 %v17, 126
    %v499 = vpop.permute.xlu0 %498
    %500 = vrot.lane.b32.xlu0 %v18, 126
    %v501 = vpop.permute.xlu0 %500
    %502 = vrot.lane.b32.xlu0 %v19, 126
    %v503 = vpop.permute.xlu0 %502
    %504 = vrot.lane.b32.xlu0 %v20, 126
    %v505 = vpop.permute.xlu0 %504
    %506 = vrot.lane.b32.xlu0 %v21, 126
    %v507 = vpop.permute.xlu0 %506
    %vm508 = vcmask 1031168
    %v509 = vsel %vm508, %v495, %v497
    %v510 = vsel %vm508, %v497, %v499
    %v511 = vsel %vm508, %v499, %v501
    %v512 = vsel %vm508, %v501, %v503
    %v513 = vsel %vm508, %v503, %v505
    %v514 = vsel %vm508, %v505, %v507
    %v522 = vsel %vm59, %v493, 0
    %524 = vmatprep.subr.mxu0 %v510
    %525 = vmatpush1.msra.mxu0 %v509
    %526 = vmatprep.subr.mxu0 0.0
    %527 = vmatpush1.msra.mxu0 0.0
    %528 = vmatprep.subr.mxu0 0.0
    %529 = vmatpush1.msra.mxu0 0.0
    %530 = vmatprep.subr.mxu0 0.0
    %531 = vmatpush1.msra.mxu0 0.0
    %532 = vmatprep.subr.mxu0 0.0
    %533 = vmatpush1.msra.mxu0 0.0
    %534 = vmatprep.subr.mxu0 0.0
    %535 = vmatpush1.msra.mxu0 0.0
    %536 = vmatprep.subr.mxu0 0.0
    %537 = vmatpush1.msra.mxu0 0.0
    %538 = vmatprep.subr.mxu0 0.0
    %539 = vmatpush1.msra.mxu0 0.0
    %540 = vmatprep.subr.mxu0 0.0
    %541 = vmatpush1.msra.mxu0 0.0
    %542 = vmatprep.subr.mxu0 0.0
    %543 = vmatpush1.msra.mxu0 0.0
    %544 = vmatprep.subr.mxu0 0.0
    %545 = vmatpush1.msra.mxu0 0.0
    %546 = vmatprep.subr.mxu0 0.0
    %547 = vmatpush1.msra.mxu0 0.0
    %548 = vmatprep.subr.mxu0 0.0
    %549 = vmatpush1.msra.mxu0 0.0
    %550 = vmatprep.subr.mxu0 0.0
    %551 = vmatpush1.msra.mxu0 0.0
    %552 = vmatprep.subr.mxu0 0.0
    %553 = vmatpush1.msra.mxu0 0.0
    %554 = vmatprep.subr.mxu0 0.0
    %555 = vmatpush1.msra.mxu0 0.0
    %556 = vmatprep.subr.mxu0 0.0
    %557 = vmatpush1.msra.mxu0 0.0
    %558 = vmatprep.subr.mxu0 0.0
    %559 = vmatpush1.msra.mxu0 0.0
    %560 = vmatprep.subr.mxu0 0.0
    %561 = vmatpush1.msra.mxu0 0.0
    %562 = vmatprep.subr.mxu0 0.0
    %563 = vmatpush1.msra.mxu0 0.0
    %564 = vmatprep.subr.mxu0 0.0
    %565 = vmatpush1.msra.mxu0 0.0
    %566 = vmatprep.subr.mxu0 0.0
    %567 = vmatpush1.msra.mxu0 0.0
    %568 = vmatprep.subr.mxu0 0.0
    %569 = vmatpush1.msra.mxu0 0.0
    %570 = vmatprep.subr.mxu0 0.0
    %571 = vmatpush1.msra.mxu0 0.0
    %572 = vmatprep.subr.mxu0 0.0
    %573 = vmatpush1.msra.mxu0 0.0
    %574 = vmatprep.subr.mxu0 0.0
    %575 = vmatpush1.msra.mxu0 0.0
    %576 = vmatprep.subr.mxu0 0.0
    %577 = vmatpush1.msra.mxu0 0.0
    %578 = vmatprep.subr.mxu0 0.0
    %579 = vmatpush1.msra.mxu0 0.0
    %580 = vmatprep.subr.mxu0 0.0
    %581 = vmatpush1.msra.mxu0 0.0
    %582 = vmatprep.subr.mxu0 0.0
    %583 = vmatpush1.msra.mxu0 0.0
    %584 = vmatprep.subr.mxu0 0.0
    %585 = vmatpush1.msra.mxu0 0.0
    %586 = vmatprep.subr.mxu0 0.0
    %587 = vmatpush1.msra.mxu0 0.0
    %588 = vmatprep.mubr.f32.mxu0 0.0
    %589 = vmatmul.mubr.f32.gmra.mrb[0].mxu0 %v522
    %v590 = vpop.f32.mrb[0].mxu0
    %v591 = vadd.f32 0.0, %v590
    %v592 = vpop.f32.mrb[0].mxu0
    %v593 = vadd.f32 0.0, %v592
    %594 = vdwg.mxu0
    %595 = vmatprep.subr.mxu0 %v512
    %596 = vmatpush1.msra.mxu0 %v511
    %597 = vmatprep.subr.mxu0 0.0
    %598 = vmatpush1.msra.mxu0 0.0
    %599 = vmatprep.subr.mxu0 0.0
    %600 = vmatpush1.msra.mxu0 0.0
    %601 = vmatprep.subr.mxu0 0.0
    %602 = vmatpush1.msra.mxu0 0.0
    %603 = vmatprep.subr.mxu0 0.0
    %604 = vmatpush1.msra.mxu0 0.0
    %605 = vmatprep.subr.mxu0 0.0
    %606 = vmatpush1.msra.mxu0 0.0
    %607 = vmatprep.subr.mxu0 0.0
    %608 = vmatpush1.msra.mxu0 0.0
    %609 = vmatprep.subr.mxu0 0.0
    %610 = vmatpush1.msra.mxu0 0.0
    %611 = vmatprep.subr.mxu0 0.0
    %612 = vmatpush1.msra.mxu0 0.0
    %613 = vmatprep.subr.mxu0 0.0
    %614 = vmatpush1.msra.mxu0 0.0
    %615 = vmatprep.subr.mxu0 0.0
    %616 = vmatpush1.msra.mxu0 0.0
    %617 = vmatprep.subr.mxu0 0.0
    %618 = vmatpush1.msra.mxu0 0.0
    %619 = vmatprep.subr.mxu0 0.0
    %620 = vmatpush1.msra.mxu0 0.0
    %621 = vmatprep.subr.mxu0 0.0
    %622 = vmatpush1.msra.mxu0 0.0
    %623 = vmatprep.subr.mxu0 0.0
    %624 = vmatpush1.msra.mxu0 0.0
    %625 = vmatprep.subr.mxu0 0.0
    %626 = vmatpush1.msra.mxu0 0.0
    %627 = vmatprep.subr.mxu0 0.0
    %628 = vmatpush1.msra.mxu0 0.0
    %629 = vmatprep.subr.mxu0 0.0
    %630 = vmatpush1.msra.mxu0 0.0
    %631 = vmatprep.subr.mxu0 0.0
    %632 = vmatpush1.msra.mxu0 0.0
    %633 = vmatprep.subr.mxu0 0.0
    %634 = vmatpush1.msra.mxu0 0.0
    %635 = vmatprep.subr.mxu0 0.0
    %636 = vmatpush1.msra.mxu0 0.0
    %637 = vmatprep.subr.mxu0 0.0
    %638 = vmatpush1.msra.mxu0 0.0
    %639 = vmatprep.subr.mxu0 0.0
    %640 = vmatpush1.msra.mxu0 0.0
    %641 = vmatprep.subr.mxu0 0.0
    %642 = vmatpush1.msra.mxu0 0.0
    %643 = vmatprep.subr.mxu0 0.0
    %644 = vmatpush1.msra.mxu0 0.0
    %645 = vmatprep.subr.mxu0 0.0
    %646 = vmatpush1.msra.mxu0 0.0
    %647 = vmatprep.subr.mxu0 0.0
    %648 = vmatpush1.msra.mxu0 0.0
    %649 = vmatprep.subr.mxu0 0.0
    %650 = vmatpush1.msra.mxu0 0.0
    %651 = vmatprep.subr.mxu0 0.0
    %652 = vmatpush1.msra.mxu0 0.0
    %653 = vmatprep.subr.mxu0 0.0
    %654 = vmatpush1.msra.mxu0 0.0
    %655 = vmatprep.subr.mxu0 0.0
    %656 = vmatpush1.msra.mxu0 0.0
    %657 = vmatprep.subr.mxu0 0.0
    %658 = vmatpush1.msra.mxu0 0.0
    %659 = vmatprep.mubr.f32.mxu0 0.0
    %660 = vmatmul.mubr.f32.gmra.mrb[0].mxu0 %v522
    %v661 = vpop.f32.mrb[0].mxu0
    %v662 = vadd.f32 0.0, %v661
    %v663 = vpop.f32.mrb[0].mxu0
    %v664 = vadd.f32 0.0, %v663
    %665 = vdwg.mxu0
    %666 = vmatprep.subr.mxu0 %v514
    %667 = vmatpush1.msra.mxu0 %v513
    %668 = vmatprep.subr.mxu0 0.0
    %669 = vmatpush1.msra.mxu0 0.0
    %670 = vmatprep.subr.mxu0 0.0
    %671 = vmatpush1.msra.mxu0 0.0
    %672 = vmatprep.subr.mxu0 0.0
    %673 = vmatpush1.msra.mxu0 0.0
    %674 = vmatprep.subr.mxu0 0.0
    %675 = vmatpush1.msra.mxu0 0.0
    %676 = vmatprep.subr.mxu0 0.0
    %677 = vmatpush1.msra.mxu0 0.0
    %678 = vmatprep.subr.mxu0 0.0
    %679 = vmatpush1.msra.mxu0 0.0
    %680 = vmatprep.subr.mxu0 0.0
    %681 = vmatpush1.msra.mxu0 0.0
    %682 = vmatprep.subr.mxu0 0.0
    %683 = vmatpush1.msra.mxu0 0.0
    %684 = vmatprep.subr.mxu0 0.0
    %685 = vmatpush1.msra.mxu0 0.0
    %686 = vmatprep.subr.mxu0 0.0
    %687 = vmatpush1.msra.mxu0 0.0
    %688 = vmatprep.subr.mxu0 0.0
    %689 = vmatpush1.msra.mxu0 0.0
    %690 = vmatprep.subr.mxu0 0.0
    %691 = vmatpush1.msra.mxu0 0.0
    %692 = vmatprep.subr.mxu0 0.0
    %693 = vmatpush1.msra.mxu0 0.0
    %694 = vmatprep.subr.mxu0 0.0
    %695 = vmatpush1.msra.mxu0 0.0
    %696 = vmatprep.subr.mxu0 0.0
    %697 = vmatpush1.msra.mxu0 0.0
    %698 = vmatprep.subr.mxu0 0.0
    %699 = vmatpush1.msra.mxu0 0.0
    %700 = vmatprep.subr.mxu0 0.0
    %701 = vmatpush1.msra.mxu0 0.0
    %702 = vmatprep.subr.mxu0 0.0
    %703 = vmatpush1.msra.mxu0 0.0
    %704 = vmatprep.subr.mxu0 0.0
    %705 = vmatpush1.msra.mxu0 0.0
    %706 = vmatprep.subr.mxu0 0.0
    %707 = vmatpush1.msra.mxu0 0.0
    %708 = vmatprep.subr.mxu0 0.0
    %709 = vmatpush1.msra.mxu0 0.0
    %710 = vmatprep.subr.mxu0 0.0
    %711 = vmatpush1.msra.mxu0 0.0
    %712 = vmatprep.subr.mxu0 0.0
    %713 = vmatpush1.msra.mxu0 0.0
    %714 = vmatprep.subr.mxu0 0.0
    %715 = vmatpush1.msra.mxu0 0.0
    %716 = vmatprep.subr.mxu0 0.0
    %717 = vmatpush1.msra.mxu0 0.0
    %718 = vmatprep.subr.mxu0 0.0
    %719 = vmatpush1.msra.mxu0 0.0
    %720 = vmatprep.subr.mxu0 0.0
    %721 = vmatpush1.msra.mxu0 0.0
    %722 = vmatprep.subr.mxu0 0.0
    %723 = vmatpush1.msra.mxu0 0.0
    %724 = vmatprep.subr.mxu0 0.0
    %725 = vmatpush1.msra.mxu0 0.0
    %726 = vmatprep.subr.mxu0 0.0
    %727 = vmatpush1.msra.mxu0 0.0
    %728 = vmatprep.subr.mxu0 0.0
    %729 = vmatpush1.msra.mxu0 0.0
    %730 = vmatprep.mubr.f32.mxu0 0.0
    %731 = vmatmul.mubr.f32.gmra.mrb[0].mxu0 %v522
    %v732 = vpop.f32.mrb[0].mxu0
    %v733 = vadd.f32 0.0, %v732
    %v734 = vpop.f32.mrb[0].mxu0
    %v735 = vadd.f32 0.0, %v734
    %736 = vdwg.mxu0
    %v737 = vadd.f32 %v346, %v591
    %v738 = vadd.f32 %v348, %v593
    %v739 = vadd.f32 %v417, %v662
    %v740 = vadd.f32 %v419, %v664
    %v741 = vadd.f32 %v488, %v733
    %v742 = vadd.f32 %v490, %v735
    %s743 = scalar_lea.vmem %s1, 24
    %v744 = vld [vmem:[%s743] sm:$0xff]
    %745 = vrot.lane.b32.xlu0 %v15, 110
    %v746 = vpop.permute.xlu0 %745
    %747 = vrot.lane.b32.xlu0 %v16, 110
    %v748 = vpop.permute.xlu0 %747
    %749 = vrot.lane.b32.xlu0 %v17, 110
    %v750 = vpop.permute.xlu0 %749
    %751 = vrot.lane.b32.xlu0 %v18, 110
    %v752 = vpop.permute.xlu0 %751
    %753 = vrot.lane.b32.xlu0 %v19, 110
    %v754 = vpop.permute.xlu0 %753
    %755 = vrot.lane.b32.xlu0 %v20, 110
    %v756 = vpop.permute.xlu0 %755
    %757 = vrot.lane.b32.xlu0 %v21, 110
    %v758 = vpop.permute.xlu0 %757
    %vm759 = vcmask 900096
    %v760 = vsel %vm759, %v746, %v748
    %v761 = vsel %vm759, %v748, %v750
    %v762 = vsel %vm759, %v750, %v752
    %v763 = vsel %vm759, %v752, %v754
    %v764 = vsel %vm759, %v754, %v756
    %v765 = vsel %vm759, %v756, %v758
    %v773 = vsel %vm59, %v744, 0
    %775 = vmatprep.subr.mxu0 %v761
    %776 = vmatpush1.msra.mxu0 %v760
    %777 = vmatprep.subr.mxu0 0.0
    %778 = vmatpush1.msra.mxu0 0.0
    %779 = vmatprep.subr.mxu0 0.0
    %780 = vmatpush1.msra.mxu0 0.0
    %781 = vmatprep.subr.mxu0 0.0
    %782 = vmatpush1.msra.mxu0 0.0
    %783 = vmatprep.subr.mxu0 0.0
    %784 = vmatpush1.msra.mxu0 0.0
    %785 = vmatprep.subr.mxu0 0.0
    %786 = vmatpush1.msra.mxu0 0.0
    %787 = vmatprep.subr.mxu0 0.0
    %788 = vmatpush1.msra.mxu0 0.0
    %789 = vmatprep.subr.mxu0 0.0
    %790 = vmatpush1.msra.mxu0 0.0
    %791 = vmatprep.subr.mxu0 0.0
    %792 = vmatpush1.msra.mxu0 0.0
    %793 = vmatprep.subr.mxu0 0.0
    %794 = vmatpush1.msra.mxu0 0.0
    %795 = vmatprep.subr.mxu0 0.0
    %796 = vmatpush1.msra.mxu0 0.0
    %797 = vmatprep.subr.mxu0 0.0
    %798 = vmatpush1.msra.mxu0 0.0
    %799 = vmatprep.subr.mxu0 0.0
    %800 = vmatpush1.msra.mxu0 0.0
    %801 = vmatprep.subr.mxu0 0.0
    %802 = vmatpush1.msra.mxu0 0.0
    %803 = vmatprep.subr.mxu0 0.0
    %804 = vmatpush1.msra.mxu0 0.0
    %805 = vmatprep.subr.mxu0 0.0
    %806 = vmatpush1.msra.mxu0 0.0
    %807 = vmatprep.subr.mxu0 0.0
    %808 = vmatpush1.msra.mxu0 0.0
    %809 = vmatprep.subr.mxu0 0.0
    %810 = vmatpush1.msra.mxu0 0.0
    %811 = vmatprep.subr.mxu0 0.0
    %812 = vmatpush1.msra.mxu0 0.0
    %813 = vmatprep.subr.mxu0 0.0
    %814 = vmatpush1.msra.mxu0 0.0
    %815 = vmatprep.subr.mxu0 0.0
    %816 = vmatpush1.msra.mxu0 0.0
    %817 = vmatprep.subr.mxu0 0.0
    %818 = vmatpush1.msra.mxu0 0.0
    %819 = vmatprep.subr.mxu0 0.0
    %820 = vmatpush1.msra.mxu0 0.0
    %821 = vmatprep.subr.mxu0 0.0
    %822 = vmatpush1.msra.mxu0 0.0
    %823 = vmatprep.subr.mxu0 0.0
    %824 = vmatpush1.msra.mxu0 0.0
    %825 = vmatprep.subr.mxu0 0.0
    %826 = vmatpush1.msra.mxu0 0.0
    %827 = vmatprep.subr.mxu0 0.0
    %828 = vmatpush1.msra.mxu0 0.0
    %829 = vmatprep.subr.mxu0 0.0
    %830 = vmatpush1.msra.mxu0 0.0
    %831 = vmatprep.subr.mxu0 0.0
    %832 = vmatpush1.msra.mxu0 0.0
    %833 = vmatprep.subr.mxu0 0.0
    %834 = vmatpush1.msra.mxu0 0.0
    %835 = vmatprep.subr.mxu0 0.0
    %836 = vmatpush1.msra.mxu0 0.0
    %837 = vmatprep.subr.mxu0 0.0
    %838 = vmatpush1.msra.mxu0 0.0
    %839 = vmatprep.mubr.f32.mxu0 0.0
    %840 = vmatmul.mubr.f32.gmra.mrb[0].mxu0 %v773
    %v841 = vpop.f32.mrb[0].mxu0
    %v842 = vadd.f32 0.0, %v841
    %v843 = vpop.f32.mrb[0].mxu0
    %v844 = vadd.f32 0.0, %v843
    %845 = vdwg.mxu0
    %846 = vmatprep.subr.mxu0 %v763
    %847 = vmatpush1.msra.mxu0 %v762
    %848 = vmatprep.subr.mxu0 0.0
    %849 = vmatpush1.msra.mxu0 0.0
    %850 = vmatprep.subr.mxu0 0.0
    %851 = vmatpush1.msra.mxu0 0.0
    %852 = vmatprep.subr.mxu0 0.0
    %853 = vmatpush1.msra.mxu0 0.0
    %854 = vmatprep.subr.mxu0 0.0
    %855 = vmatpush1.msra.mxu0 0.0
    %856 = vmatprep.subr.mxu0 0.0
    %857 = vmatpush1.msra.mxu0 0.0
    %858 = vmatprep.subr.mxu0 0.0
    %859 = vmatpush1.msra.mxu0 0.0
    %860 = vmatprep.subr.mxu0 0.0
    %861 = vmatpush1.msra.mxu0 0.0
    %862 = vmatprep.subr.mxu0 0.0
    %863 = vmatpush1.msra.mxu0 0.0
    %864 = vmatprep.subr.mxu0 0.0
    %865 = vmatpush1.msra.mxu0 0.0
    %866 = vmatprep.subr.mxu0 0.0
    %867 = vmatpush1.msra.mxu0 0.0
    %868 = vmatprep.subr.mxu0 0.0
    %869 = vmatpush1.msra.mxu0 0.0
    %870 = vmatprep.subr.mxu0 0.0
    %871 = vmatpush1.msra.mxu0 0.0
    %872 = vmatprep.subr.mxu0 0.0
    %873 = vmatpush1.msra.mxu0 0.0
    %874 = vmatprep.subr.mxu0 0.0
    %875 = vmatpush1.msra.mxu0 0.0
    %876 = vmatprep.subr.mxu0 0.0
    %877 = vmatpush1.msra.mxu0 0.0
    %878 = vmatprep.subr.mxu0 0.0
    %879 = vmatpush1.msra.mxu0 0.0
    %880 = vmatprep.subr.mxu0 0.0
    %881 = vmatpush1.msra.mxu0 0.0
    %882 = vmatprep.subr.mxu0 0.0
    %883 = vmatpush1.msra.mxu0 0.0
    %884 = vmatprep.subr.mxu0 0.0
    %885 = vmatpush1.msra.mxu0 0.0
    %886 = vmatprep.subr.mxu0 0.0
    %887 = vmatpush1.msra.mxu0 0.0
    %888 = vmatprep.subr.mxu0 0.0
    %889 = vmatpush1.msra.mxu0 0.0
    %890 = vmatprep.subr.mxu0 0.0
    %891 = vmatpush1.msra.mxu0 0.0
    %892 = vmatprep.subr.mxu0 0.0
    %893 = vmatpush1.msra.mxu0 0.0
    %894 = vmatprep.subr.mxu0 0.0
    %895 = vmatpush1.msra.mxu0 0.0
    %896 = vmatprep.subr.mxu0 0.0
    %897 = vmatpush1.msra.mxu0 0.0
    %898 = vmatprep.subr.mxu0 0.0
    %899 = vmatpush1.msra.mxu0 0.0
    %900 = vmatprep.subr.mxu0 0.0
    %901 = vmatpush1.msra.mxu0 0.0
    %902 = vmatprep.subr.mxu0 0.0
    %903 = vmatpush1.msra.mxu0 0.0
    %904 = vmatprep.subr.mxu0 0.0
    %905 = vmatpush1.msra.mxu0 0.0
    %906 = vmatprep.subr.mxu0 0.0
    %907 = vmatpush1.msra.mxu0 0.0
    %908 = vmatprep.subr.mxu0 0.0
    %909 = vmatpush1.msra.mxu0 0.0
    %910 = vmatprep.mubr.f32.mxu0 0.0
    %911 = vmatmul.mubr.f32.gmra.mrb[0].mxu0 %v773
    %v912 = vpop.f32.mrb[0].mxu0
    %v913 = vadd.f32 0.0, %v912
    %v914 = vpop.f32.mrb[0].mxu0
    %v915 = vadd.f32 0.0, %v914
    %916 = vdwg.mxu0
    %917 = vmatprep.subr.mxu0 %v765
    %918 = vmatpush1.msra.mxu0 %v764
    %919 = vmatprep.subr.mxu0 0.0
    %920 = vmatpush1.msra.mxu0 0.0
    %921 = vmatprep.subr.mxu0 0.0
    %922 = vmatpush1.msra.mxu0 0.0
    %923 = vmatprep.subr.mxu0 0.0
    %924 = vmatpush1.msra.mxu0 0.0
    %925 = vmatprep.subr.mxu0 0.0
    %926 = vmatpush1.msra.mxu0 0.0
    %927 = vmatprep.subr.mxu0 0.0
    %928 = vmatpush1.msra.mxu0 0.0
    %929 = vmatprep.subr.mxu0 0.0
    %930 = vmatpush1.msra.mxu0 0.0
    %931 = vmatprep.subr.mxu0 0.0
    %932 = vmatpush1.msra.mxu0 0.0
    %933 = vmatprep.subr.mxu0 0.0
    %934 = vmatpush1.msra.mxu0 0.0
    %935 = vmatprep.subr.mxu0 0.0
    %936 = vmatpush1.msra.mxu0 0.0
    %937 = vmatprep.subr.mxu0 0.0
    %938 = vmatpush1.msra.mxu0 0.0
    %939 = vmatprep.subr.mxu0 0.0
    %940 = vmatpush1.msra.mxu0 0.0
    %941 = vmatprep.subr.mxu0 0.0
    %942 = vmatpush1.msra.mxu0 0.0
    %943 = vmatprep.subr.mxu0 0.0
    %944 = vmatpush1.msra.mxu0 0.0
    %945 = vmatprep.subr.mxu0 0.0
    %946 = vmatpush1.msra.mxu0 0.0
    %947 = vmatprep.subr.mxu0 0.0
    %948 = vmatpush1.msra.mxu0 0.0
    %949 = vmatprep.subr.mxu0 0.0
    %950 = vmatpush1.msra.mxu0 0.0
    %951 = vmatprep.subr.mxu0 0.0
    %952 = vmatpush1.msra.mxu0 0.0
    %953 = vmatprep.subr.mxu0 0.0
    %954 = vmatpush1.msra.mxu0 0.0
    %955 = vmatprep.subr.mxu0 0.0
    %956 = vmatpush1.msra.mxu0 0.0
    %957 = vmatprep.subr.mxu0 0.0
    %958 = vmatpush1.msra.mxu0 0.0
    %959 = vmatprep.subr.mxu0 0.0
    %960 = vmatpush1.msra.mxu0 0.0
    %961 = vmatprep.subr.mxu0 0.0
    %962 = vmatpush1.msra.mxu0 0.0
    %963 = vmatprep.subr.mxu0 0.0
    %964 = vmatpush1.msra.mxu0 0.0
    %965 = vmatprep.subr.mxu0 0.0
    %966 = vmatpush1.msra.mxu0 0.0
    %967 = vmatprep.subr.mxu0 0.0
    %968 = vmatpush1.msra.mxu0 0.0
    %969 = vmatprep.subr.mxu0 0.0
    %970 = vmatpush1.msra.mxu0 0.0
    %971 = vmatprep.subr.mxu0 0.0
    %972 = vmatpush1.msra.mxu0 0.0
    %973 = vmatprep.subr.mxu0 0.0
    %974 = vmatpush1.msra.mxu0 0.0
    %975 = vmatprep.subr.mxu0 0.0
    %976 = vmatpush1.msra.mxu0 0.0
    %977 = vmatprep.subr.mxu0 0.0
    %978 = vmatpush1.msra.mxu0 0.0
    %979 = vmatprep.subr.mxu0 0.0
    %980 = vmatpush1.msra.mxu0 0.0
    %981 = vmatprep.mubr.f32.mxu0 0.0
    %982 = vmatmul.mubr.f32.gmra.mrb[0].mxu0 %v773
    %v983 = vpop.f32.mrb[0].mxu0
    %v984 = vadd.f32 0.0, %v983
    %v985 = vpop.f32.mrb[0].mxu0
    %v986 = vadd.f32 0.0, %v985
    %987 = vdwg.mxu0
    %v988 = vadd.f32 %v737, %v842
    %v989 = vadd.f32 %v738, %v844
    %v990 = vadd.f32 %v739, %v913
    %v991 = vadd.f32 %v740, %v915
    %v992 = vadd.f32 %v741, %v984
    %v993 = vadd.f32 %v742, %v986
    %s994 = scalar_lea.vmem %s1, 32
    %v995 = vld [vmem:[%s994] sm:$0xff]
    %996 = vrot.lane.b32.xlu0 %v15, 109
    %v997 = vpop.permute.xlu0 %996
    %998 = vrot.lane.b32.xlu0 %v16, 109
    %v999 = vpop.permute.xlu0 %998
    %1000 = vrot.lane.b32.xlu0 %v17, 109
    %v1001 = vpop.permute.xlu0 %1000
    %1002 = vrot.lane.b32.xlu0 %v18, 109
    %v1003 = vpop.permute.xlu0 %1002
    %1004 = vrot.lane.b32.xlu0 %v19, 109
    %v1005 = vpop.permute.xlu0 %1004
    %1006 = vrot.lane.b32.xlu0 %v20, 109
    %v1007 = vpop.permute.xlu0 %1006
    %1008 = vrot.lane.b32.xlu0 %v21, 109
    %v1009 = vpop.permute.xlu0 %1008
    %vm1010 = vcmask 891904
    %v1011 = vsel %vm1010, %v997, %v999
    %v1012 = vsel %vm1010, %v999, %v1001
    %v1013 = vsel %vm1010, %v1001, %v1003
    %v1014 = vsel %vm1010, %v1003, %v1005
    %v1015 = vsel %vm1010, %v1005, %v1007
    %v1016 = vsel %vm1010, %v1007, %v1009
    %v1024 = vsel %vm59, %v995, 0
    %1026 = vmatprep.subr.mxu0 %v1012
    %1027 = vmatpush1.msra.mxu0 %v1011
    %1028 = vmatprep.subr.mxu0 0.0
    %1029 = vmatpush1.msra.mxu0 0.0
    %1030 = vmatprep.subr.mxu0 0.0
    %1031 = vmatpush1.msra.mxu0 0.0
    %1032 = vmatprep.subr.mxu0 0.0
    %1033 = vmatpush1.msra.mxu0 0.0
    %1034 = vmatprep.subr.mxu0 0.0
    %1035 = vmatpush1.msra.mxu0 0.0
    %1036 = vmatprep.subr.mxu0 0.0
    %1037 = vmatpush1.msra.mxu0 0.0
    %1038 = vmatprep.subr.mxu0 0.0
    %1039 = vmatpush1.msra.mxu0 0.0
    %1040 = vmatprep.subr.mxu0 0.0
    %1041 = vmatpush1.msra.mxu0 0.0
    %1042 = vmatprep.subr.mxu0 0.0
    %1043 = vmatpush1.msra.mxu0 0.0
    %1044 = vmatprep.subr.mxu0 0.0
    %1045 = vmatpush1.msra.mxu0 0.0
    %1046 = vmatprep.subr.mxu0 0.0
    %1047 = vmatpush1.msra.mxu0 0.0
    %1048 = vmatprep.subr.mxu0 0.0
    %1049 = vmatpush1.msra.mxu0 0.0
    %1050 = vmatprep.subr.mxu0 0.0
    %1051 = vmatpush1.msra.mxu0 0.0
    %1052 = vmatprep.subr.mxu0 0.0
    %1053 = vmatpush1.msra.mxu0 0.0
    %1054 = vmatprep.subr.mxu0 0.0
    %1055 = vmatpush1.msra.mxu0 0.0
    %1056 = vmatprep.subr.mxu0 0.0
    %1057 = vmatpush1.msra.mxu0 0.0
    %1058 = vmatprep.subr.mxu0 0.0
    %1059 = vmatpush1.msra.mxu0 0.0
    %1060 = vmatprep.subr.mxu0 0.0
    %1061 = vmatpush1.msra.mxu0 0.0
    %1062 = vmatprep.subr.mxu0 0.0
    %1063 = vmatpush1.msra.mxu0 0.0
    %1064 = vmatprep.subr.mxu0 0.0
    %1065 = vmatpush1.msra.mxu0 0.0
    %1066 = vmatprep.subr.mxu0 0.0
    %1067 = vmatpush1.msra.mxu0 0.0
    %1068 = vmatprep.subr.mxu0 0.0
    %1069 = vmatpush1.msra.mxu0 0.0
    %1070 = vmatprep.subr.mxu0 0.0
    %1071 = vmatpush1.msra.mxu0 0.0
    %1072 = vmatprep.subr.mxu0 0.0
    %1073 = vmatpush1.msra.mxu0 0.0
    %1074 = vmatprep.subr.mxu0 0.0
    %1075 = vmatpush1.msra.mxu0 0.0
    %1076 = vmatprep.subr.mxu0 0.0
    %1077 = vmatpush1.msra.mxu0 0.0
    %1078 = vmatprep.subr.mxu0 0.0
    %1079 = vmatpush1.msra.mxu0 0.0
    %1080 = vmatprep.subr.mxu0 0.0
    %1081 = vmatpush1.msra.mxu0 0.0
    %1082 = vmatprep.subr.mxu0 0.0
    %1083 = vmatpush1.msra.mxu0 0.0
    %1084 = vmatprep.subr.mxu0 0.0
    %1085 = vmatpush1.msra.mxu0 0.0
    %1086 = vmatprep.subr.mxu0 0.0
    %1087 = vmatpush1.msra.mxu0 0.0
    %1088 = vmatprep.subr.mxu0 0.0
    %1089 = vmatpush1.msra.mxu0 0.0
    %1090 = vmatprep.mubr.f32.mxu0 0.0
    %1091 = vmatmul.mubr.f32.gmra.mrb[0].mxu0 %v1024
    %v1092 = vpop.f32.mrb[0].mxu0
    %v1093 = vadd.f32 0.0, %v1092
    %v1094 = vpop.f32.mrb[0].mxu0
    %v1095 = vadd.f32 0.0, %v1094
    %1096 = vdwg.mxu0
    %1097 = vmatprep.subr.mxu0 %v1014
    %1098 = vmatpush1.msra.mxu0 %v1013
    %1099 = vmatprep.subr.mxu0 0.0
    %1100 = vmatpush1.msra.mxu0 0.0
    %1101 = vmatprep.subr.mxu0 0.0
    %1102 = vmatpush1.msra.mxu0 0.0
    %1103 = vmatprep.subr.mxu0 0.0
    %1104 = vmatpush1.msra.mxu0 0.0
    %1105 = vmatprep.subr.mxu0 0.0
    %1106 = vmatpush1.msra.mxu0 0.0
    %1107 = vmatprep.subr.mxu0 0.0
    %1108 = vmatpush1.msra.mxu0 0.0
    %1109 = vmatprep.subr.mxu0 0.0
    %1110 = vmatpush1.msra.mxu0 0.0
    %1111 = vmatprep.subr.mxu0 0.0
    %1112 = vmatpush1.msra.mxu0 0.0
    %1113 = vmatprep.subr.mxu0 0.0
    %1114 = vmatpush1.msra.mxu0 0.0
    %1115 = vmatprep.subr.mxu0 0.0
    %1116 = vmatpush1.msra.mxu0 0.0
    %1117 = vmatprep.subr.mxu0 0.0
    %1118 = vmatpush1.msra.mxu0 0.0
    %1119 = vmatprep.subr.mxu0 0.0
    %1120 = vmatpush1.msra.mxu0 0.0
    %1121 = vmatprep.subr.mxu0 0.0
    %1122 = vmatpush1.msra.mxu0 0.0
    %1123 = vmatprep.subr.mxu0 0.0
    %1124 = vmatpush1.msra.mxu0 0.0
    %1125 = vmatprep.subr.mxu0 0.0
    %1126 = vmatpush1.msra.mxu0 0.0
    %1127 = vmatprep.subr.mxu0 0.0
    %1128 = vmatpush1.msra.mxu0 0.0
    %1129 = vmatprep.subr.mxu0 0.0
    %1130 = vmatpush1.msra.mxu0 0.0
    %1131 = vmatprep.subr.mxu0 0.0
    %1132 = vmatpush1.msra.mxu0 0.0
    %1133 = vmatprep.subr.mxu0 0.0
    %1134 = vmatpush1.msra.mxu0 0.0
    %1135 = vmatprep.subr.mxu0 0.0
    %1136 = vmatpush1.msra.mxu0 0.0
    %1137 = vmatprep.subr.mxu0 0.0
    %1138 = vmatpush1.msra.mxu0 0.0
    %1139 = vmatprep.subr.mxu0 0.0
    %1140 = vmatpush1.msra.mxu0 0.0
    %1141 = vmatprep.subr.mxu0 0.0
    %1142 = vmatpush1.msra.mxu0 0.0
    %1143 = vmatprep.subr.mxu0 0.0
    %1144 = vmatpush1.msra.mxu0 0.0
    %1145 = vmatprep.subr.mxu0 0.0
    %1146 = vmatpush1.msra.mxu0 0.0
    %1147 = vmatprep.subr.mxu0 0.0
    %1148 = vmatpush1.msra.mxu0 0.0
    %1149 = vmatprep.subr.mxu0 0.0
    %1150 = vmatpush1.msra.mxu0 0.0
    %1151 = vmatprep.subr.mxu0 0.0
    %1152 = vmatpush1.msra.mxu0 0.0
    %1153 = vmatprep.subr.mxu0 0.0
    %1154 = vmatpush1.msra.mxu0 0.0
    %1155 = vmatprep.subr.mxu0 0.0
    %1156 = vmatpush1.msra.mxu0 0.0
    %1157 = vmatprep.subr.mxu0 0.0
    %1158 = vmatpush1.msra.mxu0 0.0
    %1159 = vmatprep.subr.mxu0 0.0
    %1160 = vmatpush1.msra.mxu0 0.0
    %1161 = vmatprep.mubr.f32.mxu0 0.0
    %1162 = vmatmul.mubr.f32.gmra.mrb[0].mxu0 %v1024
    %v1163 = vpop.f32.mrb[0].mxu0
    %v1164 = vadd.f32 0.0, %v1163
    %v1165 = vpop.f32.mrb[0].mxu0
    %v1166 = vadd.f32 0.0, %v1165
    %1167 = vdwg.mxu0
    %1168 = vmatprep.subr.mxu0 %v1016
    %1169 = vmatpush1.msra.mxu0 %v1015
    %1170 = vmatprep.subr.mxu0 0.0
    %1171 = vmatpush1.msra.mxu0 0.0
    %1172 = vmatprep.subr.mxu0 0.0
    %1173 = vmatpush1.msra.mxu0 0.0
    %1174 = vmatprep.subr.mxu0 0.0
    %1175 = vmatpush1.msra.mxu0 0.0
    %1176 = vmatprep.subr.mxu0 0.0
    %1177 = vmatpush1.msra.mxu0 0.0
    %1178 = vmatprep.subr.mxu0 0.0
    %1179 = vmatpush1.msra.mxu0 0.0
    %1180 = vmatprep.subr.mxu0 0.0
    %1181 = vmatpush1.msra.mxu0 0.0
    %1182 = vmatprep.subr.mxu0 0.0
    %1183 = vmatpush1.msra.mxu0 0.0
    %1184 = vmatprep.subr.mxu0 0.0
    %1185 = vmatpush1.msra.mxu0 0.0
    %1186 = vmatprep.subr.mxu0 0.0
    %1187 = vmatpush1.msra.mxu0 0.0
    %1188 = vmatprep.subr.mxu0 0.0
    %1189 = vmatpush1.msra.mxu0 0.0
    %1190 = vmatprep.subr.mxu0 0.0
    %1191 = vmatpush1.msra.mxu0 0.0
    %1192 = vmatprep.subr.mxu0 0.0
    %1193 = vmatpush1.msra.mxu0 0.0
    %1194 = vmatprep.subr.mxu0 0.0
    %1195 = vmatpush1.msra.mxu0 0.0
    %1196 = vmatprep.subr.mxu0 0.0
    %1197 = vmatpush1.msra.mxu0 0.0
    %1198 = vmatprep.subr.mxu0 0.0
    %1199 = vmatpush1.msra.mxu0 0.0
    %1200 = vmatprep.subr.mxu0 0.0
    %1201 = vmatpush1.msra.mxu0 0.0
    %1202 = vmatprep.subr.mxu0 0.0
    %1203 = vmatpush1.msra.mxu0 0.0
    %1204 = vmatprep.subr.mxu0 0.0
    %1205 = vmatpush1.msra.mxu0 0.0
    %1206 = vmatprep.subr.mxu0 0.0
    %1207 = vmatpush1.msra.mxu0 0.0
    %1208 = vmatprep.subr.mxu0 0.0
    %1209 = vmatpush1.msra.mxu0 0.0
    %1210 = vmatprep.subr.mxu0 0.0
    %1211 = vmatpush1.msra.mxu0 0.0
    %1212 = vmatprep.subr.mxu0 0.0
    %1213 = vmatpush1.msra.mxu0 0.0
    %1214 = vmatprep.subr.mxu0 0.0
    %1215 = vmatpush1.msra.mxu0 0.0
    %1216 = vmatprep.subr.mxu0 0.0
    %1217 = vmatpush1.msra.mxu0 0.0
    %1218 = vmatprep.subr.mxu0 0.0
    %1219 = vmatpush1.msra.mxu0 0.0
    %1220 = vmatprep.subr.mxu0 0.0
    %1221 = vmatpush1.msra.mxu0 0.0
    %1222 = vmatprep.subr.mxu0 0.0
    %1223 = vmatpush1.msra.mxu0 0.0
    %1224 = vmatprep.subr.mxu0 0.0
    %1225 = vmatpush1.msra.mxu0 0.0
    %1226 = vmatprep.subr.mxu0 0.0
    %1227 = vmatpush1.msra.mxu0 0.0
    %1228 = vmatprep.subr.mxu0 0.0
    %1229 = vmatpush1.msra.mxu0 0.0
    %1230 = vmatprep.subr.mxu0 0.0
    %1231 = vmatpush1.msra.mxu0 0.0
    %1232 = vmatprep.mubr.f32.mxu0 0.0
    %1233 = vmatmul.mubr.f32.gmra.mrb[0].mxu0 %v1024
    %v1234 = vpop.f32.mrb[0].mxu0
    %v1235 = vadd.f32 0.0, %v1234
    %v1236 = vpop.f32.mrb[0].mxu0
    %v1237 = vadd.f32 0.0, %v1236
    %1238 = vdwg.mxu0
    %v1239 = vadd.f32 %v988, %v1093
    %v1240 = vadd.f32 %v989, %v1095
    %v1241 = vadd.f32 %v990, %v1164
    %v1242 = vadd.f32 %v991, %v1166
    %v1243 = vadd.f32 %v992, %v1235
    %v1244 = vadd.f32 %v993, %v1237
    %s1245 = scalar_lea.vmem %s1, 40
    %v1246 = vld [vmem:[%s1245] sm:$0xff]
    %1247 = vrot.lane.b32.xlu0 %v15, 108
    %v1248 = vpop.permute.xlu0 %1247
    %1249 = vrot.lane.b32.xlu0 %v16, 108
    %v1250 = vpop.permute.xlu0 %1249
    %1251 = vrot.lane.b32.xlu0 %v17, 108
    %v1252 = vpop.permute.xlu0 %1251
    %1253 = vrot.lane.b32.xlu0 %v18, 108
    %v1254 = vpop.permute.xlu0 %1253
    %1255 = vrot.lane.b32.xlu0 %v19, 108
    %v1256 = vpop.permute.xlu0 %1255
    %1257 = vrot.lane.b32.xlu0 %v20, 108
    %v1258 = vpop.permute.xlu0 %1257
    %1259 = vrot.lane.b32.xlu0 %v21, 108
    %v1260 = vpop.permute.xlu0 %1259
    %vm1261 = vcmask 883712
    %v1262 = vsel %vm1261, %v1248, %v1250
    %v1263 = vsel %vm1261, %v1250, %v1252
    %v1264 = vsel %vm1261, %v1252, %v1254
    %v1265 = vsel %vm1261, %v1254, %v1256
    %v1266 = vsel %vm1261, %v1256, %v1258
    %v1267 = vsel %vm1261, %v1258, %v1260
    %v1275 = vsel %vm59, %v1246, 0
    %1277 = vmatprep.subr.mxu0 %v1263
    %1278 = vmatpush1.msra.mxu0 %v1262
    %1279 = vmatprep.subr.mxu0 0.0
    %1280 = vmatpush1.msra.mxu0 0.0
    %1281 = vmatprep.subr.mxu0 0.0
    %1282 = vmatpush1.msra.mxu0 0.0
    %1283 = vmatprep.subr.mxu0 0.0
    %1284 = vmatpush1.msra.mxu0 0.0
    %1285 = vmatprep.subr.mxu0 0.0
    %1286 = vmatpush1.msra.mxu0 0.0
    %1287 = vmatprep.subr.mxu0 0.0
    %1288 = vmatpush1.msra.mxu0 0.0
    %1289 = vmatprep.subr.mxu0 0.0
    %1290 = vmatpush1.msra.mxu0 0.0
    %1291 = vmatprep.subr.mxu0 0.0
    %1292 = vmatpush1.msra.mxu0 0.0
    %1293 = vmatprep.subr.mxu0 0.0
    %1294 = vmatpush1.msra.mxu0 0.0
    %1295 = vmatprep.subr.mxu0 0.0
    %1296 = vmatpush1.msra.mxu0 0.0
    %1297 = vmatprep.subr.mxu0 0.0
    %1298 = vmatpush1.msra.mxu0 0.0
    %1299 = vmatprep.subr.mxu0 0.0
    %1300 = vmatpush1.msra.mxu0 0.0
    %1301 = vmatprep.subr.mxu0 0.0
    %1302 = vmatpush1.msra.mxu0 0.0
    %1303 = vmatprep.subr.mxu0 0.0
    %1304 = vmatpush1.msra.mxu0 0.0
    %1305 = vmatprep.subr.mxu0 0.0
    %1306 = vmatpush1.msra.mxu0 0.0
    %1307 = vmatprep.subr.mxu0 0.0
    %1308 = vmatpush1.msra.mxu0 0.0
    %1309 = vmatprep.subr.mxu0 0.0
    %1310 = vmatpush1.msra.mxu0 0.0
    %1311 = vmatprep.subr.mxu0 0.0
    %1312 = vmatpush1.msra.mxu0 0.0
    %1313 = vmatprep.subr.mxu0 0.0
    %1314 = vmatpush1.msra.mxu0 0.0
    %1315 = vmatprep.subr.mxu0 0.0
    %1316 = vmatpush1.msra.mxu0 0.0
    %1317 = vmatprep.subr.mxu0 0.0
    %1318 = vmatpush1.msra.mxu0 0.0
    %1319 = vmatprep.subr.mxu0 0.0
    %1320 = vmatpush1.msra.mxu0 0.0
    %1321 = vmatprep.subr.mxu0 0.0
    %1322 = vmatpush1.msra.mxu0 0.0
    %1323 = vmatprep.subr.mxu0 0.0
    %1324 = vmatpush1.msra.mxu0 0.0
    %1325 = vmatprep.subr.mxu0 0.0
    %1326 = vmatpush1.msra.mxu0 0.0
    %1327 = vmatprep.subr.mxu0 0.0
    %1328 = vmatpush1.msra.mxu0 0.0
    %1329 = vmatprep.subr.mxu0 0.0
    %1330 = vmatpush1.msra.mxu0 0.0
    %1331 = vmatprep.subr.mxu0 0.0
    %1332 = vmatpush1.msra.mxu0 0.0
    %1333 = vmatprep.subr.mxu0 0.0
    %1334 = vmatpush1.msra.mxu0 0.0
    %1335 = vmatprep.subr.mxu0 0.0
    %1336 = vmatpush1.msra.mxu0 0.0
    %1337 = vmatprep.subr.mxu0 0.0
    %1338 = vmatpush1.msra.mxu0 0.0
    %1339 = vmatprep.subr.mxu0 0.0
    %1340 = vmatpush1.msra.mxu0 0.0
    %1341 = vmatprep.mubr.f32.mxu0 0.0
    %1342 = vmatmul.mubr.f32.gmra.mrb[0].mxu0 %v1275
    %v1343 = vpop.f32.mrb[0].mxu0
    %v1344 = vadd.f32 0.0, %v1343
    %v1345 = vpop.f32.mrb[0].mxu0
    %v1346 = vadd.f32 0.0, %v1345
    %1347 = vdwg.mxu0
    %1348 = vmatprep.subr.mxu0 %v1265
    %1349 = vmatpush1.msra.mxu0 %v1264
    %1350 = vmatprep.subr.mxu0 0.0
    %1351 = vmatpush1.msra.mxu0 0.0
    %1352 = vmatprep.subr.mxu0 0.0
    %1353 = vmatpush1.msra.mxu0 0.0
    %1354 = vmatprep.subr.mxu0 0.0
    %1355 = vmatpush1.msra.mxu0 0.0
    %1356 = vmatprep.subr.mxu0 0.0
    %1357 = vmatpush1.msra.mxu0 0.0
    %1358 = vmatprep.subr.mxu0 0.0
    %1359 = vmatpush1.msra.mxu0 0.0
    %1360 = vmatprep.subr.mxu0 0.0
    %1361 = vmatpush1.msra.mxu0 0.0
    %1362 = vmatprep.subr.mxu0 0.0
    %1363 = vmatpush1.msra.mxu0 0.0
    %1364 = vmatprep.subr.mxu0 0.0
    %1365 = vmatpush1.msra.mxu0 0.0
    %1366 = vmatprep.subr.mxu0 0.0
    %1367 = vmatpush1.msra.mxu0 0.0
    %1368 = vmatprep.subr.mxu0 0.0
    %1369 = vmatpush1.msra.mxu0 0.0
    %1370 = vmatprep.subr.mxu0 0.0
    %1371 = vmatpush1.msra.mxu0 0.0
    %1372 = vmatprep.subr.mxu0 0.0
    %1373 = vmatpush1.msra.mxu0 0.0
    %1374 = vmatprep.subr.mxu0 0.0
    %1375 = vmatpush1.msra.mxu0 0.0
    %1376 = vmatprep.subr.mxu0 0.0
    %1377 = vmatpush1.msra.mxu0 0.0
    %1378 = vmatprep.subr.mxu0 0.0
    %1379 = vmatpush1.msra.mxu0 0.0
    %1380 = vmatprep.subr.mxu0 0.0
    %1381 = vmatpush1.msra.mxu0 0.0
    %1382 = vmatprep.subr.mxu0 0.0
    %1383 = vmatpush1.msra.mxu0 0.0
    %1384 = vmatprep.subr.mxu0 0.0
    %1385 = vmatpush1.msra.mxu0 0.0
    %1386 = vmatprep.subr.mxu0 0.0
    %1387 = vmatpush1.msra.mxu0 0.0
    %1388 = vmatprep.subr.mxu0 0.0
    %1389 = vmatpush1.msra.mxu0 0.0
    %1390 = vmatprep.subr.mxu0 0.0
    %1391 = vmatpush1.msra.mxu0 0.0
    %1392 = vmatprep.subr.mxu0 0.0
    %1393 = vmatpush1.msra.mxu0 0.0
    %1394 = vmatprep.subr.mxu0 0.0
    %1395 = vmatpush1.msra.mxu0 0.0
    %1396 = vmatprep.subr.mxu0 0.0
    %1397 = vmatpush1.msra.mxu0 0.0
    %1398 = vmatprep.subr.mxu0 0.0
    %1399 = vmatpush1.msra.mxu0 0.0
    %1400 = vmatprep.subr.mxu0 0.0
    %1401 = vmatpush1.msra.mxu0 0.0
    %1402 = vmatprep.subr.mxu0 0.0
    %1403 = vmatpush1.msra.mxu0 0.0
    %1404 = vmatprep.subr.mxu0 0.0
    %1405 = vmatpush1.msra.mxu0 0.0
    %1406 = vmatprep.subr.mxu0 0.0
    %1407 = vmatpush1.msra.mxu0 0.0
    %1408 = vmatprep.subr.mxu0 0.0
    %1409 = vmatpush1.msra.mxu0 0.0
    %1410 = vmatprep.subr.mxu0 0.0
    %1411 = vmatpush1.msra.mxu0 0.0
    %1412 = vmatprep.mubr.f32.mxu0 0.0
    %1413 = vmatmul.mubr.f32.gmra.mrb[0].mxu0 %v1275
    %v1414 = vpop.f32.mrb[0].mxu0
    %v1415 = vadd.f32 0.0, %v1414
    %v1416 = vpop.f32.mrb[0].mxu0
    %v1417 = vadd.f32 0.0, %v1416
    %1418 = vdwg.mxu0
    %1419 = vmatprep.subr.mxu0 %v1267
    %1420 = vmatpush1.msra.mxu0 %v1266
    %1421 = vmatprep.subr.mxu0 0.0
    %1422 = vmatpush1.msra.mxu0 0.0
    %1423 = vmatprep.subr.mxu0 0.0
    %1424 = vmatpush1.msra.mxu0 0.0
    %1425 = vmatprep.subr.mxu0 0.0
    %1426 = vmatpush1.msra.mxu0 0.0
    %1427 = vmatprep.subr.mxu0 0.0
    %1428 = vmatpush1.msra.mxu0 0.0
    %1429 = vmatprep.subr.mxu0 0.0
    %1430 = vmatpush1.msra.mxu0 0.0
    %1431 = vmatprep.subr.mxu0 0.0
    %1432 = vmatpush1.msra.mxu0 0.0
    %1433 = vmatprep.subr.mxu0 0.0
    %1434 = vmatpush1.msra.mxu0 0.0
    %1435 = vmatprep.subr.mxu0 0.0
    %1436 = vmatpush1.msra.mxu0 0.0
    %1437 = vmatprep.subr.mxu0 0.0
    %1438 = vmatpush1.msra.mxu0 0.0
    %1439 = vmatprep.subr.mxu0 0.0
    %1440 = vmatpush1.msra.mxu0 0.0
    %1441 = vmatprep.subr.mxu0 0.0
    %1442 = vmatpush1.msra.mxu0 0.0
    %1443 = vmatprep.subr.mxu0 0.0
    %1444 = vmatpush1.msra.mxu0 0.0
    %1445 = vmatprep.subr.mxu0 0.0
    %1446 = vmatpush1.msra.mxu0 0.0
    %1447 = vmatprep.subr.mxu0 0.0
    %1448 = vmatpush1.msra.mxu0 0.0
    %1449 = vmatprep.subr.mxu0 0.0
    %1450 = vmatpush1.msra.mxu0 0.0
    %1451 = vmatprep.subr.mxu0 0.0
    %1452 = vmatpush1.msra.mxu0 0.0
    %1453 = vmatprep.subr.mxu0 0.0
    %1454 = vmatpush1.msra.mxu0 0.0
    %1455 = vmatprep.subr.mxu0 0.0
    %1456 = vmatpush1.msra.mxu0 0.0
    %1457 = vmatprep.subr.mxu0 0.0
    %1458 = vmatpush1.msra.mxu0 0.0
    %1459 = vmatprep.subr.mxu0 0.0
    %1460 = vmatpush1.msra.mxu0 0.0
    %1461 = vmatprep.subr.mxu0 0.0
    %1462 = vmatpush1.msra.mxu0 0.0
    %1463 = vmatprep.subr.mxu0 0.0
    %1464 = vmatpush1.msra.mxu0 0.0
    %1465 = vmatprep.subr.mxu0 0.0
    %1466 = vmatpush1.msra.mxu0 0.0
    %1467 = vmatprep.subr.mxu0 0.0
    %1468 = vmatpush1.msra.mxu0 0.0
    %1469 = vmatprep.subr.mxu0 0.0
    %1470 = vmatpush1.msra.mxu0 0.0
    %1471 = vmatprep.subr.mxu0 0.0
    %1472 = vmatpush1.msra.mxu0 0.0
    %1473 = vmatprep.subr.mxu0 0.0
    %1474 = vmatpush1.msra.mxu0 0.0
    %1475 = vmatprep.subr.mxu0 0.0
    %1476 = vmatpush1.msra.mxu0 0.0
    %1477 = vmatprep.subr.mxu0 0.0
    %1478 = vmatpush1.msra.mxu0 0.0
    %1479 = vmatprep.subr.mxu0 0.0
    %1480 = vmatpush1.msra.mxu0 0.0
    %1481 = vmatprep.subr.mxu0 0.0
    %1482 = vmatpush1.msra.mxu0 0.0
    %1483 = vmatprep.mubr.f32.mxu0 0.0
    %1484 = vmatmul.mubr.f32.gmra.mrb[0].mxu0 %v1275
    %v1485 = vpop.f32.mrb[0].mxu0
    %v1486 = vadd.f32 0.0, %v1485
    %v1487 = vpop.f32.mrb[0].mxu0
    %v1488 = vadd.f32 0.0, %v1487
    %1489 = vdwg.mxu0
    %v1490 = vadd.f32 %v1239, %v1344
    %v1491 = vadd.f32 %v1240, %v1346
    %v1492 = vadd.f32 %v1241, %v1415
    %v1493 = vadd.f32 %v1242, %v1417
    %v1494 = vadd.f32 %v1243, %v1486
    %v1495 = vadd.f32 %v1244, %v1488
    %s1496 = scalar_lea.vmem %s1, 48
    %v1497 = vld [vmem:[%s1496] sm:$0xff]
    %1498 = vrot.lane.b32.xlu0 %v15, 92
    %v1499 = vpop.permute.xlu0 %1498
    %1500 = vrot.lane.b32.xlu0 %v16, 92
    %v1501 = vpop.permute.xlu0 %1500
    %1502 = vrot.lane.b32.xlu0 %v17, 92
    %v1503 = vpop.permute.xlu0 %1502
    %1504 = vrot.lane.b32.xlu0 %v18, 92
    %v1505 = vpop.permute.xlu0 %1504
    %1506 = vrot.lane.b32.xlu0 %v19, 92
    %v1507 = vpop.permute.xlu0 %1506
    %1508 = vrot.lane.b32.xlu0 %v20, 92
    %v1509 = vpop.permute.xlu0 %1508
    %1510 = vrot.lane.b32.xlu0 %v21, 92
    %v1511 = vpop.permute.xlu0 %1510
    %vm1512 = vcmask 752640
    %v1513 = vsel %vm1512, %v1499, %v1501
    %v1514 = vsel %vm1512, %v1501, %v1503
    %v1515 = vsel %vm1512, %v1503, %v1505
    %v1516 = vsel %vm1512, %v1505, %v1507
    %v1517 = vsel %vm1512, %v1507, %v1509
    %v1518 = vsel %vm1512, %v1509, %v1511
    %v1526 = vsel %vm59, %v1497, 0
    %1528 = vmatprep.subr.mxu0 %v1514
    %1529 = vmatpush1.msra.mxu0 %v1513
    %1530 = vmatprep.subr.mxu0 0.0
    %1531 = vmatpush1.msra.mxu0 0.0
    %1532 = vmatprep.subr.mxu0 0.0
    %1533 = vmatpush1.msra.mxu0 0.0
    %1534 = vmatprep.subr.mxu0 0.0
    %1535 = vmatpush1.msra.mxu0 0.0
    %1536 = vmatprep.subr.mxu0 0.0
    %1537 = vmatpush1.msra.mxu0 0.0
    %1538 = vmatprep.subr.mxu0 0.0
    %1539 = vmatpush1.msra.mxu0 0.0
    %1540 = vmatprep.subr.mxu0 0.0
    %1541 = vmatpush1.msra.mxu0 0.0
    %1542 = vmatprep.subr.mxu0 0.0
    %1543 = vmatpush1.msra.mxu0 0.0
    %1544 = vmatprep.subr.mxu0 0.0
    %1545 = vmatpush1.msra.mxu0 0.0
    %1546 = vmatprep.subr.mxu0 0.0
    %1547 = vmatpush1.msra.mxu0 0.0
    %1548 = vmatprep.subr.mxu0 0.0
    %1549 = vmatpush1.msra.mxu0 0.0
    %1550 = vmatprep.subr.mxu0 0.0
    %1551 = vmatpush1.msra.mxu0 0.0
    %1552 = vmatprep.subr.mxu0 0.0
    %1553 = vmatpush1.msra.mxu0 0.0
    %1554 = vmatprep.subr.mxu0 0.0
    %1555 = vmatpush1.msra.mxu0 0.0
    %1556 = vmatprep.subr.mxu0 0.0
    %1557 = vmatpush1.msra.mxu0 0.0
    %1558 = vmatprep.subr.mxu0 0.0
    %1559 = vmatpush1.msra.mxu0 0.0
    %1560 = vmatprep.subr.mxu0 0.0
    %1561 = vmatpush1.msra.mxu0 0.0
    %1562 = vmatprep.subr.mxu0 0.0
    %1563 = vmatpush1.msra.mxu0 0.0
    %1564 = vmatprep.subr.mxu0 0.0
    %1565 = vmatpush1.msra.mxu0 0.0
    %1566 = vmatprep.subr.mxu0 0.0
    %1567 = vmatpush1.msra.mxu0 0.0
    %1568 = vmatprep.subr.mxu0 0.0
    %1569 = vmatpush1.msra.mxu0 0.0
    %1570 = vmatprep.subr.mxu0 0.0
    %1571 = vmatpush1.msra.mxu0 0.0
    %1572 = vmatprep.subr.mxu0 0.0
    %1573 = vmatpush1.msra.mxu0 0.0
    %1574 = vmatprep.subr.mxu0 0.0
    %1575 = vmatpush1.msra.mxu0 0.0
    %1576 = vmatprep.subr.mxu0 0.0
    %1577 = vmatpush1.msra.mxu0 0.0
    %1578 = vmatprep.subr.mxu0 0.0
    %1579 = vmatpush1.msra.mxu0 0.0
    %1580 = vmatprep.subr.mxu0 0.0
    %1581 = vmatpush1.msra.mxu0 0.0
    %1582 = vmatprep.subr.mxu0 0.0
    %1583 = vmatpush1.msra.mxu0 0.0
    %1584 = vmatprep.subr.mxu0 0.0
    %1585 = vmatpush1.msra.mxu0 0.0
    %1586 = vmatprep.subr.mxu0 0.0
    %1587 = vmatpush1.msra.mxu0 0.0
    %1588 = vmatprep.subr.mxu0 0.0
    %1589 = vmatpush1.msra.mxu0 0.0
    %1590 = vmatprep.subr.mxu0 0.0
    %1591 = vmatpush1.msra.mxu0 0.0
    %1592 = vmatprep.mubr.f32.mxu0 0.0
    %1593 = vmatmul.mubr.f32.gmra.mrb[0].mxu0 %v1526
    %v1594 = vpop.f32.mrb[0].mxu0
    %v1595 = vadd.f32 0.0, %v1594
    %v1596 = vpop.f32.mrb[0].mxu0
    %v1597 = vadd.f32 0.0, %v1596
    %1598 = vdwg.mxu0
    %1599 = vmatprep.subr.mxu0 %v1516
    %1600 = vmatpush1.msra.mxu0 %v1515
    %1601 = vmatprep.subr.mxu0 0.0
    %1602 = vmatpush1.msra.mxu0 0.0
    %1603 = vmatprep.subr.mxu0 0.0
    %1604 = vmatpush1.msra.mxu0 0.0
    %1605 = vmatprep.subr.mxu0 0.0
    %1606 = vmatpush1.msra.mxu0 0.0
    %1607 = vmatprep.subr.mxu0 0.0
    %1608 = vmatpush1.msra.mxu0 0.0
    %1609 = vmatprep.subr.mxu0 0.0
    %1610 = vmatpush1.msra.mxu0 0.0
    %1611 = vmatprep.subr.mxu0 0.0
    %1612 = vmatpush1.msra.mxu0 0.0
    %1613 = vmatprep.subr.mxu0 0.0
    %1614 = vmatpush1.msra.mxu0 0.0
    %1615 = vmatprep.subr.mxu0 0.0
    %1616 = vmatpush1.msra.mxu0 0.0
    %1617 = vmatprep.subr.mxu0 0.0
    %1618 = vmatpush1.msra.mxu0 0.0
    %1619 = vmatprep.subr.mxu0 0.0
    %1620 = vmatpush1.msra.mxu0 0.0
    %1621 = vmatprep.subr.mxu0 0.0
    %1622 = vmatpush1.msra.mxu0 0.0
    %1623 = vmatprep.subr.mxu0 0.0
    %1624 = vmatpush1.msra.mxu0 0.0
    %1625 = vmatprep.subr.mxu0 0.0
    %1626 = vmatpush1.msra.mxu0 0.0
    %1627 = vmatprep.subr.mxu0 0.0
    %1628 = vmatpush1.msra.mxu0 0.0
    %1629 = vmatprep.subr.mxu0 0.0
    %1630 = vmatpush1.msra.mxu0 0.0
    %1631 = vmatprep.subr.mxu0 0.0
    %1632 = vmatpush1.msra.mxu0 0.0
    %1633 = vmatprep.subr.mxu0 0.0
    %1634 = vmatpush1.msra.mxu0 0.0
    %1635 = vmatprep.subr.mxu0 0.0
    %1636 = vmatpush1.msra.mxu0 0.0
    %1637 = vmatprep.subr.mxu0 0.0
    %1638 = vmatpush1.msra.mxu0 0.0
    %1639 = vmatprep.subr.mxu0 0.0
    %1640 = vmatpush1.msra.mxu0 0.0
    %1641 = vmatprep.subr.mxu0 0.0
    %1642 = vmatpush1.msra.mxu0 0.0
    %1643 = vmatprep.subr.mxu0 0.0
    %1644 = vmatpush1.msra.mxu0 0.0
    %1645 = vmatprep.subr.mxu0 0.0
    %1646 = vmatpush1.msra.mxu0 0.0
    %1647 = vmatprep.subr.mxu0 0.0
    %1648 = vmatpush1.msra.mxu0 0.0
    %1649 = vmatprep.subr.mxu0 0.0
    %1650 = vmatpush1.msra.mxu0 0.0
    %1651 = vmatprep.subr.mxu0 0.0
    %1652 = vmatpush1.msra.mxu0 0.0
    %1653 = vmatprep.subr.mxu0 0.0
    %1654 = vmatpush1.msra.mxu0 0.0
    %1655 = vmatprep.subr.mxu0 0.0
    %1656 = vmatpush1.msra.mxu0 0.0
    %1657 = vmatprep.subr.mxu0 0.0
    %1658 = vmatpush1.msra.mxu0 0.0
    %1659 = vmatprep.subr.mxu0 0.0
    %1660 = vmatpush1.msra.mxu0 0.0
    %1661 = vmatprep.subr.mxu0 0.0
    %1662 = vmatpush1.msra.mxu0 0.0
    %1663 = vmatprep.mubr.f32.mxu0 0.0
    %1664 = vmatmul.mubr.f32.gmra.mrb[0].mxu0 %v1526
    %v1665 = vpop.f32.mrb[0].mxu0
    %v1666 = vadd.f32 0.0, %v1665
    %v1667 = vpop.f32.mrb[0].mxu0
    %v1668 = vadd.f32 0.0, %v1667
    %1669 = vdwg.mxu0
    %1670 = vmatprep.subr.mxu0 %v1518
    %1671 = vmatpush1.msra.mxu0 %v1517
    %1672 = vmatprep.subr.mxu0 0.0
    %1673 = vmatpush1.msra.mxu0 0.0
    %1674 = vmatprep.subr.mxu0 0.0
    %1675 = vmatpush1.msra.mxu0 0.0
    %1676 = vmatprep.subr.mxu0 0.0
    %1677 = vmatpush1.msra.mxu0 0.0
    %1678 = vmatprep.subr.mxu0 0.0
    %1679 = vmatpush1.msra.mxu0 0.0
    %1680 = vmatprep.subr.mxu0 0.0
    %1681 = vmatpush1.msra.mxu0 0.0
    %1682 = vmatprep.subr.mxu0 0.0
    %1683 = vmatpush1.msra.mxu0 0.0
    %1684 = vmatprep.subr.mxu0 0.0
    %1685 = vmatpush1.msra.mxu0 0.0
    %1686 = vmatprep.subr.mxu0 0.0
    %1687 = vmatpush1.msra.mxu0 0.0
    %1688 = vmatprep.subr.mxu0 0.0
    %1689 = vmatpush1.msra.mxu0 0.0
    %1690 = vmatprep.subr.mxu0 0.0
    %1691 = vmatpush1.msra.mxu0 0.0
    %1692 = vmatprep.subr.mxu0 0.0
    %1693 = vmatpush1.msra.mxu0 0.0
    %1694 = vmatprep.subr.mxu0 0.0
    %1695 = vmatpush1.msra.mxu0 0.0
    %1696 = vmatprep.subr.mxu0 0.0
    %1697 = vmatpush1.msra.mxu0 0.0
    %1698 = vmatprep.subr.mxu0 0.0
    %1699 = vmatpush1.msra.mxu0 0.0
    %1700 = vmatprep.subr.mxu0 0.0
    %1701 = vmatpush1.msra.mxu0 0.0
    %1702 = vmatprep.subr.mxu0 0.0
    %1703 = vmatpush1.msra.mxu0 0.0
    %1704 = vmatprep.subr.mxu0 0.0
    %1705 = vmatpush1.msra.mxu0 0.0
    %1706 = vmatprep.subr.mxu0 0.0
    %1707 = vmatpush1.msra.mxu0 0.0
    %1708 = vmatprep.subr.mxu0 0.0
    %1709 = vmatpush1.msra.mxu0 0.0
    %1710 = vmatprep.subr.mxu0 0.0
    %1711 = vmatpush1.msra.mxu0 0.0
    %1712 = vmatprep.subr.mxu0 0.0
    %1713 = vmatpush1.msra.mxu0 0.0
    %1714 = vmatprep.subr.mxu0 0.0
    %1715 = vmatpush1.msra.mxu0 0.0
    %1716 = vmatprep.subr.mxu0 0.0
    %1717 = vmatpush1.msra.mxu0 0.0
    %1718 = vmatprep.subr.mxu0 0.0
    %1719 = vmatpush1.msra.mxu0 0.0
    %1720 = vmatprep.subr.mxu0 0.0
    %1721 = vmatpush1.msra.mxu0 0.0
    %1722 = vmatprep.subr.mxu0 0.0
    %1723 = vmatpush1.msra.mxu0 0.0
    %1724 = vmatprep.subr.mxu0 0.0
    %1725 = vmatpush1.msra.mxu0 0.0
    %1726 = vmatprep.subr.mxu0 0.0
    %1727 = vmatpush1.msra.mxu0 0.0
    %1728 = vmatprep.subr.mxu0 0.0
    %1729 = vmatpush1.msra.mxu0 0.0
    %1730 = vmatprep.subr.mxu0 0.0
    %1731 = vmatpush1.msra.mxu0 0.0
    %1732 = vmatprep.subr.mxu0 0.0
    %1733 = vmatpush1.msra.mxu0 0.0
    %1734 = vmatprep.mubr.f32.mxu0 0.0
    %1735 = vmatmul.mubr.f32.gmra.mrb[0].mxu0 %v1526
    %v1736 = vpop.f32.mrb[0].mxu0
    %v1737 = vadd.f32 0.0, %v1736
    %v1738 = vpop.f32.mrb[0].mxu0
    %v1739 = vadd.f32 0.0, %v1738
    %1740 = vdwg.mxu0
    %v1741 = vadd.f32 %v1490, %v1595
    %v1742 = vadd.f32 %v1491, %v1597
    %v1743 = vadd.f32 %v1492, %v1666
    %v1744 = vadd.f32 %v1493, %v1668
    %v1745 = vadd.f32 %v1494, %v1737
    %v1746 = vadd.f32 %v1495, %v1739
    %s1747 = scalar_lea.vmem %s1, 56
    %v1748 = vld [vmem:[%s1747] sm:$0xff]
    %1749 = vrot.lane.b32.xlu0 %v15, 91
    %v1750 = vpop.permute.xlu0 %1749
    %1751 = vrot.lane.b32.xlu0 %v16, 91
    %v1752 = vpop.permute.xlu0 %1751
    %1753 = vrot.lane.b32.xlu0 %v17, 91
    %v1754 = vpop.permute.xlu0 %1753
    %1755 = vrot.lane.b32.xlu0 %v18, 91
    %v1756 = vpop.permute.xlu0 %1755
    %1757 = vrot.lane.b32.xlu0 %v19, 91
    %v1758 = vpop.permute.xlu0 %1757
    %1759 = vrot.lane.b32.xlu0 %v20, 91
    %v1760 = vpop.permute.xlu0 %1759
    %1761 = vrot.lane.b32.xlu0 %v21, 91
    %v1762 = vpop.permute.xlu0 %1761
    %vm1763 = vcmask 744448
    %v1764 = vsel %vm1763, %v1750, %v1752
    %v1765 = vsel %vm1763, %v1752, %v1754
    %v1766 = vsel %vm1763, %v1754, %v1756
    %v1767 = vsel %vm1763, %v1756, %v1758
    %v1768 = vsel %vm1763, %v1758, %v1760
    %v1769 = vsel %vm1763, %v1760, %v1762
    %v1777 = vsel %vm59, %v1748, 0
    %1779 = vmatprep.subr.mxu0 %v1765
    %1780 = vmatpush1.msra.mxu0 %v1764
    %1781 = vmatprep.subr.mxu0 0.0
    %1782 = vmatpush1.msra.mxu0 0.0
    %1783 = vmatprep.subr.mxu0 0.0
    %1784 = vmatpush1.msra.mxu0 0.0
    %1785 = vmatprep.subr.mxu0 0.0
    %1786 = vmatpush1.msra.mxu0 0.0
    %1787 = vmatprep.subr.mxu0 0.0
    %1788 = vmatpush1.msra.mxu0 0.0
    %1789 = vmatprep.subr.mxu0 0.0
    %1790 = vmatpush1.msra.mxu0 0.0
    %1791 = vmatprep.subr.mxu0 0.0
    %1792 = vmatpush1.msra.mxu0 0.0
    %1793 = vmatprep.subr.mxu0 0.0
    %1794 = vmatpush1.msra.mxu0 0.0
    %1795 = vmatprep.subr.mxu0 0.0
    %1796 = vmatpush1.msra.mxu0 0.0
    %1797 = vmatprep.subr.mxu0 0.0
    %1798 = vmatpush1.msra.mxu0 0.0
    %1799 = vmatprep.subr.mxu0 0.0
    %1800 = vmatpush1.msra.mxu0 0.0
    %1801 = vmatprep.subr.mxu0 0.0
    %1802 = vmatpush1.msra.mxu0 0.0
    %1803 = vmatprep.subr.mxu0 0.0
    %1804 = vmatpush1.msra.mxu0 0.0
    %1805 = vmatprep.subr.mxu0 0.0
    %1806 = vmatpush1.msra.mxu0 0.0
    %1807 = vmatprep.subr.mxu0 0.0
    %1808 = vmatpush1.msra.mxu0 0.0
    %1809 = vmatprep.subr.mxu0 0.0
    %1810 = vmatpush1.msra.mxu0 0.0
    %1811 = vmatprep.subr.mxu0 0.0
    %1812 = vmatpush1.msra.mxu0 0.0
    %1813 = vmatprep.subr.mxu0 0.0
    %1814 = vmatpush1.msra.mxu0 0.0
    %1815 = vmatprep.subr.mxu0 0.0
    %1816 = vmatpush1.msra.mxu0 0.0
    %1817 = vmatprep.subr.mxu0 0.0
    %1818 = vmatpush1.msra.mxu0 0.0
    %1819 = vmatprep.subr.mxu0 0.0
    %1820 = vmatpush1.msra.mxu0 0.0
    %1821 = vmatprep.subr.mxu0 0.0
    %1822 = vmatpush1.msra.mxu0 0.0
    %1823 = vmatprep.subr.mxu0 0.0
    %1824 = vmatpush1.msra.mxu0 0.0
    %1825 = vmatprep.subr.mxu0 0.0
    %1826 = vmatpush1.msra.mxu0 0.0
    %1827 = vmatprep.subr.mxu0 0.0
    %1828 = vmatpush1.msra.mxu0 0.0
    %1829 = vmatprep.subr.mxu0 0.0
    %1830 = vmatpush1.msra.mxu0 0.0
    %1831 = vmatprep.subr.mxu0 0.0
    %1832 = vmatpush1.msra.mxu0 0.0
    %1833 = vmatprep.subr.mxu0 0.0
    %1834 = vmatpush1.msra.mxu0 0.0
    %1835 = vmatprep.subr.mxu0 0.0
    %1836 = vmatpush1.msra.mxu0 0.0
    %1837 = vmatprep.subr.mxu0 0.0
    %1838 = vmatpush1.msra.mxu0 0.0
    %1839 = vmatprep.subr.mxu0 0.0
    %1840 = vmatpush1.msra.mxu0 0.0
    %1841 = vmatprep.subr.mxu0 0.0
    %1842 = vmatpush1.msra.mxu0 0.0
    %1843 = vmatprep.mubr.f32.mxu0 0.0
    %1844 = vmatmul.mubr.f32.gmra.mrb[0].mxu0 %v1777
    %v1845 = vpop.f32.mrb[0].mxu0
    %v1846 = vadd.f32 0.0, %v1845
    %v1847 = vpop.f32.mrb[0].mxu0
    %v1848 = vadd.f32 0.0, %v1847
    %1849 = vdwg.mxu0
    %1850 = vmatprep.subr.mxu0 %v1767
    %1851 = vmatpush1.msra.mxu0 %v1766
    %1852 = vmatprep.subr.mxu0 0.0
    %1853 = vmatpush1.msra.mxu0 0.0
    %1854 = vmatprep.subr.mxu0 0.0
    %1855 = vmatpush1.msra.mxu0 0.0
    %1856 = vmatprep.subr.mxu0 0.0
    %1857 = vmatpush1.msra.mxu0 0.0
    %1858 = vmatprep.subr.mxu0 0.0
    %1859 = vmatpush1.msra.mxu0 0.0
    %1860 = vmatprep.subr.mxu0 0.0
    %1861 = vmatpush1.msra.mxu0 0.0
    %1862 = vmatprep.subr.mxu0 0.0
    %1863 = vmatpush1.msra.mxu0 0.0
    %1864 = vmatprep.subr.mxu0 0.0
    %1865 = vmatpush1.msra.mxu0 0.0
    %1866 = vmatprep.subr.mxu0 0.0
    %1867 = vmatpush1.msra.mxu0 0.0
    %1868 = vmatprep.subr.mxu0 0.0
    %1869 = vmatpush1.msra.mxu0 0.0
    %1870 = vmatprep.subr.mxu0 0.0
    %1871 = vmatpush1.msra.mxu0 0.0
    %1872 = vmatprep.subr.mxu0 0.0
    %1873 = vmatpush1.msra.mxu0 0.0
    %1874 = vmatprep.subr.mxu0 0.0
    %1875 = vmatpush1.msra.mxu0 0.0
    %1876 = vmatprep.subr.mxu0 0.0
    %1877 = vmatpush1.msra.mxu0 0.0
    %1878 = vmatprep.subr.mxu0 0.0
    %1879 = vmatpush1.msra.mxu0 0.0
    %1880 = vmatprep.subr.mxu0 0.0
    %1881 = vmatpush1.msra.mxu0 0.0
    %1882 = vmatprep.subr.mxu0 0.0
    %1883 = vmatpush1.msra.mxu0 0.0
    %1884 = vmatprep.subr.mxu0 0.0
    %1885 = vmatpush1.msra.mxu0 0.0
    %1886 = vmatprep.subr.mxu0 0.0
    %1887 = vmatpush1.msra.mxu0 0.0
    %1888 = vmatprep.subr.mxu0 0.0
    %1889 = vmatpush1.msra.mxu0 0.0
    %1890 = vmatprep.subr.mxu0 0.0
    %1891 = vmatpush1.msra.mxu0 0.0
    %1892 = vmatprep.subr.mxu0 0.0
    %1893 = vmatpush1.msra.mxu0 0.0
    %1894 = vmatprep.subr.mxu0 0.0
    %1895 = vmatpush1.msra.mxu0 0.0
    %1896 = vmatprep.subr.mxu0 0.0
    %1897 = vmatpush1.msra.mxu0 0.0
    %1898 = vmatprep.subr.mxu0 0.0
    %1899 = vmatpush1.msra.mxu0 0.0
    %1900 = vmatprep.subr.mxu0 0.0
    %1901 = vmatpush1.msra.mxu0 0.0
    %1902 = vmatprep.subr.mxu0 0.0
    %1903 = vmatpush1.msra.mxu0 0.0
    %1904 = vmatprep.subr.mxu0 0.0
    %1905 = vmatpush1.msra.mxu0 0.0
    %1906 = vmatprep.subr.mxu0 0.0
    %1907 = vmatpush1.msra.mxu0 0.0
    %1908 = vmatprep.subr.mxu0 0.0
    %1909 = vmatpush1.msra.mxu0 0.0
    %1910 = vmatprep.subr.mxu0 0.0
    %1911 = vmatpush1.msra.mxu0 0.0
    %1912 = vmatprep.subr.mxu0 0.0
    %1913 = vmatpush1.msra.mxu0 0.0
    %1914 = vmatprep.mubr.f32.mxu0 0.0
    %1915 = vmatmul.mubr.f32.gmra.mrb[0].mxu0 %v1777
    %v1916 = vpop.f32.mrb[0].mxu0
    %v1917 = vadd.f32 0.0, %v1916
    %v1918 = vpop.f32.mrb[0].mxu0
    %v1919 = vadd.f32 0.0, %v1918
    %1920 = vdwg.mxu0
    %1921 = vmatprep.subr.mxu0 %v1769
    %1922 = vmatpush1.msra.mxu0 %v1768
    %1923 = vmatprep.subr.mxu0 0.0
    %1924 = vmatpush1.msra.mxu0 0.0
    %1925 = vmatprep.subr.mxu0 0.0
    %1926 = vmatpush1.msra.mxu0 0.0
    %1927 = vmatprep.subr.mxu0 0.0
    %1928 = vmatpush1.msra.mxu0 0.0
    %1929 = vmatprep.subr.mxu0 0.0
    %1930 = vmatpush1.msra.mxu0 0.0
    %1931 = vmatprep.subr.mxu0 0.0
    %1932 = vmatpush1.msra.mxu0 0.0
    %1933 = vmatprep.subr.mxu0 0.0
    %1934 = vmatpush1.msra.mxu0 0.0
    %1935 = vmatprep.subr.mxu0 0.0
    %1936 = vmatpush1.msra.mxu0 0.0
    %1937 = vmatprep.subr.mxu0 0.0
    %1938 = vmatpush1.msra.mxu0 0.0
    %1939 = vmatprep.subr.mxu0 0.0
    %1940 = vmatpush1.msra.mxu0 0.0
    %1941 = vmatprep.subr.mxu0 0.0
    %1942 = vmatpush1.msra.mxu0 0.0
    %1943 = vmatprep.subr.mxu0 0.0
    %1944 = vmatpush1.msra.mxu0 0.0
    %1945 = vmatprep.subr.mxu0 0.0
    %1946 = vmatpush1.msra.mxu0 0.0
    %1947 = vmatprep.subr.mxu0 0.0
    %1948 = vmatpush1.msra.mxu0 0.0
    %1949 = vmatprep.subr.mxu0 0.0
    %1950 = vmatpush1.msra.mxu0 0.0
    %1951 = vmatprep.subr.mxu0 0.0
    %1952 = vmatpush1.msra.mxu0 0.0
    %1953 = vmatprep.subr.mxu0 0.0
    %1954 = vmatpush1.msra.mxu0 0.0
    %1955 = vmatprep.subr.mxu0 0.0
    %1956 = vmatpush1.msra.mxu0 0.0
    %1957 = vmatprep.subr.mxu0 0.0
    %1958 = vmatpush1.msra.mxu0 0.0
    %1959 = vmatprep.subr.mxu0 0.0
    %1960 = vmatpush1.msra.mxu0 0.0
    %1961 = vmatprep.subr.mxu0 0.0
    %1962 = vmatpush1.msra.mxu0 0.0
    %1963 = vmatprep.subr.mxu0 0.0
    %1964 = vmatpush1.msra.mxu0 0.0
    %1965 = vmatprep.subr.mxu0 0.0
    %1966 = vmatpush1.msra.mxu0 0.0
    %1967 = vmatprep.subr.mxu0 0.0
    %1968 = vmatpush1.msra.mxu0 0.0
    %1969 = vmatprep.subr.mxu0 0.0
    %1970 = vmatpush1.msra.mxu0 0.0
    %1971 = vmatprep.subr.mxu0 0.0
    %1972 = vmatpush1.msra.mxu0 0.0
    %1973 = vmatprep.subr.mxu0 0.0
    %1974 = vmatpush1.msra.mxu0 0.0
    %1975 = vmatprep.subr.mxu0 0.0
    %1976 = vmatpush1.msra.mxu0 0.0
    %1977 = vmatprep.subr.mxu0 0.0
    %1978 = vmatpush1.msra.mxu0 0.0
    %1979 = vmatprep.subr.mxu0 0.0
    %1980 = vmatpush1.msra.mxu0 0.0
    %1981 = vmatprep.subr.mxu0 0.0
    %1982 = vmatpush1.msra.mxu0 0.0
    %1983 = vmatprep.subr.mxu0 0.0
    %1984 = vmatpush1.msra.mxu0 0.0
    %1985 = vmatprep.mubr.f32.mxu0 0.0
    %1986 = vmatmul.mubr.f32.gmra.mrb[0].mxu0 %v1777
    %v1987 = vpop.f32.mrb[0].mxu0
    %v1988 = vadd.f32 0.0, %v1987
    %v1989 = vpop.f32.mrb[0].mxu0
    %v1990 = vadd.f32 0.0, %v1989
    %1991 = vdwg.mxu0
    %v1992 = vadd.f32 %v1741, %v1846
    %v1993 = vadd.f32 %v1742, %v1848
    %v1994 = vadd.f32 %v1743, %v1917
    %v1995 = vadd.f32 %v1744, %v1919
    %v1996 = vadd.f32 %v1745, %v1988
    %v1997 = vadd.f32 %v1746, %v1990
    %s1998 = scalar_lea.vmem %s1, 64
    %v1999 = vld [vmem:[%s1998] sm:$0xff]
    %2000 = vrot.lane.b32.xlu0 %v15, 90
    %v2001 = vpop.permute.xlu0 %2000
    %2002 = vrot.lane.b32.xlu0 %v16, 90
    %v2003 = vpop.permute.xlu0 %2002
    %2004 = vrot.lane.b32.xlu0 %v17, 90
    %v2005 = vpop.permute.xlu0 %2004
    %2006 = vrot.lane.b32.xlu0 %v18, 90
    %v2007 = vpop.permute.xlu0 %2006
    %2008 = vrot.lane.b32.xlu0 %v19, 90
    %v2009 = vpop.permute.xlu0 %2008
    %2010 = vrot.lane.b32.xlu0 %v20, 90
    %v2011 = vpop.permute.xlu0 %2010
    %2012 = vrot.lane.b32.xlu0 %v21, 90
    %v2013 = vpop.permute.xlu0 %2012
    %vm2014 = vcmask 736256
    %v2015 = vsel %vm2014, %v2001, %v2003
    %v2016 = vsel %vm2014, %v2003, %v2005
    %v2017 = vsel %vm2014, %v2005, %v2007
    %v2018 = vsel %vm2014, %v2007, %v2009
    %v2019 = vsel %vm2014, %v2009, %v2011
    %v2020 = vsel %vm2014, %v2011, %v2013
    %v2028 = vsel %vm59, %v1999, 0
    %2030 = vmatprep.subr.mxu0 %v2016
    %2031 = vmatpush1.msra.mxu0 %v2015
    %2032 = vmatprep.subr.mxu0 0.0
    %2033 = vmatpush1.msra.mxu0 0.0
    %2034 = vmatprep.subr.mxu0 0.0
    %2035 = vmatpush1.msra.mxu0 0.0
    %2036 = vmatprep.subr.mxu0 0.0
    %2037 = vmatpush1.msra.mxu0 0.0
    %2038 = vmatprep.subr.mxu0 0.0
    %2039 = vmatpush1.msra.mxu0 0.0
    %2040 = vmatprep.subr.mxu0 0.0
    %2041 = vmatpush1.msra.mxu0 0.0
    %2042 = vmatprep.subr.mxu0 0.0
    %2043 = vmatpush1.msra.mxu0 0.0
    %2044 = vmatprep.subr.mxu0 0.0
    %2045 = vmatpush1.msra.mxu0 0.0
    %2046 = vmatprep.subr.mxu0 0.0
    %2047 = vmatpush1.msra.mxu0 0.0
    %2048 = vmatprep.subr.mxu0 0.0
    %2049 = vmatpush1.msra.mxu0 0.0
    %2050 = vmatprep.subr.mxu0 0.0
    %2051 = vmatpush1.msra.mxu0 0.0
    %2052 = vmatprep.subr.mxu0 0.0
    %2053 = vmatpush1.msra.mxu0 0.0
    %2054 = vmatprep.subr.mxu0 0.0
    %2055 = vmatpush1.msra.mxu0 0.0
    %2056 = vmatprep.subr.mxu0 0.0
    %2057 = vmatpush1.msra.mxu0 0.0
    %2058 = vmatprep.subr.mxu0 0.0
    %2059 = vmatpush1.msra.mxu0 0.0
    %2060 = vmatprep.subr.mxu0 0.0
    %2061 = vmatpush1.msra.mxu0 0.0
    %2062 = vmatprep.subr.mxu0 0.0
    %2063 = vmatpush1.msra.mxu0 0.0
    %2064 = vmatprep.subr.mxu0 0.0
    %2065 = vmatpush1.msra.mxu0 0.0
    %2066 = vmatprep.subr.mxu0 0.0
    %2067 = vmatpush1.msra.mxu0 0.0
    %2068 = vmatprep.subr.mxu0 0.0
    %2069 = vmatpush1.msra.mxu0 0.0
    %2070 = vmatprep.subr.mxu0 0.0
    %2071 = vmatpush1.msra.mxu0 0.0
    %2072 = vmatprep.subr.mxu0 0.0
    %2073 = vmatpush1.msra.mxu0 0.0
    %2074 = vmatprep.subr.mxu0 0.0
    %2075 = vmatpush1.msra.mxu0 0.0
    %2076 = vmatprep.subr.mxu0 0.0
    %2077 = vmatpush1.msra.mxu0 0.0
    %2078 = vmatprep.subr.mxu0 0.0
    %2079 = vmatpush1.msra.mxu0 0.0
    %2080 = vmatprep.subr.mxu0 0.0
    %2081 = vmatpush1.msra.mxu0 0.0
    %2082 = vmatprep.subr.mxu0 0.0
    %2083 = vmatpush1.msra.mxu0 0.0
    %2084 = vmatprep.subr.mxu0 0.0
    %2085 = vmatpush1.msra.mxu0 0.0
    %2086 = vmatprep.subr.mxu0 0.0
    %2087 = vmatpush1.msra.mxu0 0.0
    %2088 = vmatprep.subr.mxu0 0.0
    %2089 = vmatpush1.msra.mxu0 0.0
    %2090 = vmatprep.subr.mxu0 0.0
    %2091 = vmatpush1.msra.mxu0 0.0
    %2092 = vmatprep.subr.mxu0 0.0
    %2093 = vmatpush1.msra.mxu0 0.0
    %2094 = vmatprep.mubr.f32.mxu0 0.0
    %2095 = vmatmul.mubr.f32.gmra.mrb[0].mxu0 %v2028
    %v2096 = vpop.f32.mrb[0].mxu0
    %v2097 = vadd.f32 0.0, %v2096
    %v2098 = vpop.f32.mrb[0].mxu0
    %v2099 = vadd.f32 0.0, %v2098
    %2100 = vdwg.mxu0
    %2101 = vmatprep.subr.mxu0 %v2018
    %2102 = vmatpush1.msra.mxu0 %v2017
    %2103 = vmatprep.subr.mxu0 0.0
    %2104 = vmatpush1.msra.mxu0 0.0
    %2105 = vmatprep.subr.mxu0 0.0
    %2106 = vmatpush1.msra.mxu0 0.0
    %2107 = vmatprep.subr.mxu0 0.0
    %2108 = vmatpush1.msra.mxu0 0.0
    %2109 = vmatprep.subr.mxu0 0.0
    %2110 = vmatpush1.msra.mxu0 0.0
    %2111 = vmatprep.subr.mxu0 0.0
    %2112 = vmatpush1.msra.mxu0 0.0
    %2113 = vmatprep.subr.mxu0 0.0
    %2114 = vmatpush1.msra.mxu0 0.0
    %2115 = vmatprep.subr.mxu0 0.0
    %2116 = vmatpush1.msra.mxu0 0.0
    %2117 = vmatprep.subr.mxu0 0.0
    %2118 = vmatpush1.msra.mxu0 0.0
    %2119 = vmatprep.subr.mxu0 0.0
    %2120 = vmatpush1.msra.mxu0 0.0
    %2121 = vmatprep.subr.mxu0 0.0
    %2122 = vmatpush1.msra.mxu0 0.0
    %2123 = vmatprep.subr.mxu0 0.0
    %2124 = vmatpush1.msra.mxu0 0.0
    %2125 = vmatprep.subr.mxu0 0.0
    %2126 = vmatpush1.msra.mxu0 0.0
    %2127 = vmatprep.subr.mxu0 0.0
    %2128 = vmatpush1.msra.mxu0 0.0
    %2129 = vmatprep.subr.mxu0 0.0
    %2130 = vmatpush1.msra.mxu0 0.0
    %2131 = vmatprep.subr.mxu0 0.0
    %2132 = vmatpush1.msra.mxu0 0.0
    %2133 = vmatprep.subr.mxu0 0.0
    %2134 = vmatpush1.msra.mxu0 0.0
    %2135 = vmatprep.subr.mxu0 0.0
    %2136 = vmatpush1.msra.mxu0 0.0
    %2137 = vmatprep.subr.mxu0 0.0
    %2138 = vmatpush1.msra.mxu0 0.0
    %2139 = vmatprep.subr.mxu0 0.0
    %2140 = vmatpush1.msra.mxu0 0.0
    %2141 = vmatprep.subr.mxu0 0.0
    %2142 = vmatpush1.msra.mxu0 0.0
    %2143 = vmatprep.subr.mxu0 0.0
    %2144 = vmatpush1.msra.mxu0 0.0
    %2145 = vmatprep.subr.mxu0 0.0
    %2146 = vmatpush1.msra.mxu0 0.0
    %2147 = vmatprep.subr.mxu0 0.0
    %2148 = vmatpush1.msra.mxu0 0.0
    %2149 = vmatprep.subr.mxu0 0.0
    %2150 = vmatpush1.msra.mxu0 0.0
    %2151 = vmatprep.subr.mxu0 0.0
    %2152 = vmatpush1.msra.mxu0 0.0
    %2153 = vmatprep.subr.mxu0 0.0
    %2154 = vmatpush1.msra.mxu0 0.0
    %2155 = vmatprep.subr.mxu0 0.0
    %2156 = vmatpush1.msra.mxu0 0.0
    %2157 = vmatprep.subr.mxu0 0.0
    %2158 = vmatpush1.msra.mxu0 0.0
    %2159 = vmatprep.subr.mxu0 0.0
    %2160 = vmatpush1.msra.mxu0 0.0
    %2161 = vmatprep.subr.mxu0 0.0
    %2162 = vmatpush1.msra.mxu0 0.0
    %2163 = vmatprep.subr.mxu0 0.0
    %2164 = vmatpush1.msra.mxu0 0.0
    %2165 = vmatprep.mubr.f32.mxu0 0.0
    %2166 = vmatmul.mubr.f32.gmra.mrb[0].mxu0 %v2028
    %v2167 = vpop.f32.mrb[0].mxu0
    %v2168 = vadd.f32 0.0, %v2167
    %v2169 = vpop.f32.mrb[0].mxu0
    %v2170 = vadd.f32 0.0, %v2169
    %2171 = vdwg.mxu0
    %2172 = vmatprep.subr.mxu0 %v2020
    %2173 = vmatpush1.msra.mxu0 %v2019
    %2174 = vmatprep.subr.mxu0 0.0
    %2175 = vmatpush1.msra.mxu0 0.0
    %2176 = vmatprep.subr.mxu0 0.0
    %2177 = vmatpush1.msra.mxu0 0.0
    %2178 = vmatprep.subr.mxu0 0.0
    %2179 = vmatpush1.msra.mxu0 0.0
    %2180 = vmatprep.subr.mxu0 0.0
    %2181 = vmatpush1.msra.mxu0 0.0
    %2182 = vmatprep.subr.mxu0 0.0
    %2183 = vmatpush1.msra.mxu0 0.0
    %2184 = vmatprep.subr.mxu0 0.0
    %2185 = vmatpush1.msra.mxu0 0.0
    %2186 = vmatprep.subr.mxu0 0.0
    %2187 = vmatpush1.msra.mxu0 0.0
    %2188 = vmatprep.subr.mxu0 0.0
    %2189 = vmatpush1.msra.mxu0 0.0
    %2190 = vmatprep.subr.mxu0 0.0
    %2191 = vmatpush1.msra.mxu0 0.0
    %2192 = vmatprep.subr.mxu0 0.0
    %2193 = vmatpush1.msra.mxu0 0.0
    %2194 = vmatprep.subr.mxu0 0.0
    %2195 = vmatpush1.msra.mxu0 0.0
    %2196 = vmatprep.subr.mxu0 0.0
    %2197 = vmatpush1.msra.mxu0 0.0
    %2198 = vmatprep.subr.mxu0 0.0
    %2199 = vmatpush1.msra.mxu0 0.0
    %2200 = vmatprep.subr.mxu0 0.0
    %2201 = vmatpush1.msra.mxu0 0.0
    %2202 = vmatprep.subr.mxu0 0.0
    %2203 = vmatpush1.msra.mxu0 0.0
    %2204 = vmatprep.subr.mxu0 0.0
    %2205 = vmatpush1.msra.mxu0 0.0
    %2206 = vmatprep.subr.mxu0 0.0
    %2207 = vmatpush1.msra.mxu0 0.0
    %2208 = vmatprep.subr.mxu0 0.0
    %2209 = vmatpush1.msra.mxu0 0.0
    %2210 = vmatprep.subr.mxu0 0.0
    %2211 = vmatpush1.msra.mxu0 0.0
    %2212 = vmatprep.subr.mxu0 0.0
    %2213 = vmatpush1.msra.mxu0 0.0
    %2214 = vmatprep.subr.mxu0 0.0
    %2215 = vmatpush1.msra.mxu0 0.0
    %2216 = vmatprep.subr.mxu0 0.0
    %2217 = vmatpush1.msra.mxu0 0.0
    %2218 = vmatprep.subr.mxu0 0.0
    %2219 = vmatpush1.msra.mxu0 0.0
    %2220 = vmatprep.subr.mxu0 0.0
    %2221 = vmatpush1.msra.mxu0 0.0
    %2222 = vmatprep.subr.mxu0 0.0
    %2223 = vmatpush1.msra.mxu0 0.0
    %2224 = vmatprep.subr.mxu0 0.0
    %2225 = vmatpush1.msra.mxu0 0.0
    %2226 = vmatprep.subr.mxu0 0.0
    %2227 = vmatpush1.msra.mxu0 0.0
    %2228 = vmatprep.subr.mxu0 0.0
    %2229 = vmatpush1.msra.mxu0 0.0
    %2230 = vmatprep.subr.mxu0 0.0
    %2231 = vmatpush1.msra.mxu0 0.0
    %2232 = vmatprep.subr.mxu0 0.0
    %2233 = vmatpush1.msra.mxu0 0.0
    %2234 = vmatprep.subr.mxu0 0.0
    %2235 = vmatpush1.msra.mxu0 0.0
    %2236 = vmatprep.mubr.f32.mxu0 0.0
    %2237 = vmatmul.mubr.f32.gmra.mrb[0].mxu0 %v2028
    %v2238 = vpop.f32.mrb[0].mxu0
    %v2239 = vadd.f32 0.0, %v2238
    %v2240 = vpop.f32.mrb[0].mxu0
    %v2241 = vadd.f32 0.0, %v2240
    %2242 = vdwg.mxu0
    %v2243 = vadd.f32 %v1992, %v2097
    %v2244 = vadd.f32 %v1993, %v2099
    %v2245 = vadd.f32 %v1994, %v2168
    %v2246 = vadd.f32 %v1995, %v2170
    %v2247 = vadd.f32 %v1996, %v2239
    %v2248 = vadd.f32 %v1997, %v2241
    %v2249 = vld [vmem:[%s2] sm:$0xff]
    %2251 = vset.pattern.permute.xlu0 0
    %2252 = vperm.xlu0 %2251, %v2249
    %v2253 = vpop.permute.xlu0 %2252
    %v2255 = vadd.f32 %v2243, %v2253
    %v2256 = vadd.f32 %v2244, %v2253
    %v2257 = vadd.f32 %v2245, %v2253
    %v2258 = vadd.f32 %v2246, %v2253
    %v2259 = vadd.f32 %v2247, %v2253
    %v2260 = vadd.f32 %v2248, %v2253
    %2261 = vst [vmem:[#allocation2] sm:$0xff] %v2255
    %2262 = vst [vmem:[#allocation2 + $0x8] sm:$0xff] %v2256
    %2263 = vst [vmem:[#allocation2 + $0x10] sm:$0xff] %v2257
    %2264 = vst [vmem:[#allocation2 + $0x18] sm:$0xff] %v2258
    %2265 = vst [vmem:[#allocation2 + $0x20] sm:$0xff] %v2259
    %2266 = vst [vmem:[#allocation2 + $0x28] sm:$0xff] %v2260
    // Predicated region
    $region14: #{tpu_custom_call.1} parent=1 // pred_check
      _
    $region15: #{tpu_custom_call.1} parent=1 // pred_check_branch
      %2268 = sbr.rel (0) target = $region17
    $region16: #{tpu_custom_call.1} parent=1 // pred_region
      %s2270 = ssub.s32 768, 768
      %2271 = vsyncadd [#allocation3], %s2270
      %s2273 = sshll.u32 [#allocation2], 4
      %s2274 = int_to_ptr.vmem [resolvable:$true] %s2273
      %2276 = dma.vmem_to_hbm [thread:$0]  %s2274, 768, %s3, [#allocation3]
    $region17: #{tpu_custom_call.1} parent=1 // pred_fallthru
      _
    // Predicated region
    $region18: #{tpu_custom_call.1} parent=1 // pred_check
      _
    $region19: #{tpu_custom_call.1} parent=1 // pred_check_branch
      %2278 = sbr.rel (0) target = $region21
    $region20: #{tpu_custom_call.1} parent=1 // pred_region
      %2279 = dma.done [#allocation3], 768
    $region21: #{tpu_custom_call.1} parent=1 // pred_fallthru
      _
    %2280 = vsyncpa [#allocation3], 1

</llo_original>
